<compile_context>
chip_gen: v7x
topology: tpu7x:2x2x1
jax: 0.10.0
libtpu: 0.0.40
codegen_flags: <defaults>
</compile_context>

<pallas_src>
import math

import jax
import jax.numpy as jnp
from jax.experimental import pallas as pl
from jax.experimental.pallas import tpu as pltpu

LANE = 128            # TPU lane width: padded feature dims are multiples of this
MAX_TILE_B = 1024     # upper bound on batch rows per grid step


def _round_up(n, m):
    return ((n + m - 1) // m) * m


# ----------------------------- fused kernel -------------------------------- #

def _make_fused_encoder_kernel(n_hidden, z_dim):
    """Builds a kernel for a fixed (static) number of hidden layers.

    Ref order: x, eps, (w0, b0), ..., (w_{n-1}, b_{n-1}), (w_head, b_head),
               z_out, mu_out, logvar_out
    Weights are bf16 (in, out_p); biases f32 (1, out_p).
    Outputs are f32 (tile_b, Zp), lane-dense full-block stores.
    """

    def kernel(*refs):
        x_ref, eps_ref = refs[0], refs[1]
        z_ref, mu_ref, lv_ref = refs[-3], refs[-2], refs[-1]

        # hidden MLP: Linear -> ReLU; activation stays resident in vregs/VMEM,
        # carried in bf16 between layers (matmuls consume bf16 anyway).
        h = x_ref[...]                                # bf16 (tile_b, x_dim/h_p)
        for i in range(n_hidden):
            w = refs[2 + 2 * i][...]                  # bf16 (in, out_p)
            b = refs[3 + 2 * i][...]                  # f32  (1, out_p)
            y = jnp.dot(h, w, preferred_element_type=jnp.float32) + b
            h = jnp.maximum(y, 0.0).astype(jnp.bfloat16)

        # fused mu / log_var heads: single MXU matmul into (tile_b, 2*Zp)
        w_head = refs[2 + 2 * n_hidden][...]          # bf16 (h_p, 2*z_p)
        b_head = refs[3 + 2 * n_hidden][...]          # f32  (1, 2*z_p)
        head = jnp.dot(h, w_head, preferred_element_type=jnp.float32) + b_head

        zp = head.shape[-1] // 2
        mu = head[:, :zp]                             # 128-aligned slices (cheap)
        log_var = head[:, zp:]

        # widen the narrow (tile_b, z_dim) eps to the lane-padded latent width;
        # padded mu/log_var columns are 0 so padded z columns are discarded anyway.
        eps = eps_ref[...]                            # f32 (tile_b, z_dim)
        if z_dim < zp:
            eps = jnp.concatenate(
                [eps, jnp.zeros((eps.shape[0], zp - z_dim), jnp.float32)],
                axis=-1)

        # reparametrization trick (f32 elementwise)
        z = mu + jnp.exp(0.5 * log_var) * eps

        # lane-dense full-block stores
        z_ref[...] = z
        mu_ref[...] = mu
        lv_ref[...] = log_var

    return kernel


# ----------------------------- wrapper -------------------------------------- #

def encoder_forward(packed, x, eps, *, max_tile_b=MAX_TILE_B):
    """Runs the fused encoder. x: (B, x_dim), eps: (B, z_dim)."""
    z_dim = packed["z_dim"]
    x_dim = packed["x_dim"]
    zp = packed["z_pad"]
    n_hidden = len(packed["hidden"])

    B = x.shape[0]
    b8 = _round_up(B, 8)
    tile_b = min(_round_up(max_tile_b, 8), b8)        # always a multiple of 8
    # v7x has 2 TensorCores per chip: prefer a grid of >= 2 "parallel" steps so
    # the batch axis shards across both cores (harmless on v5e/v6e: 1 TC).
    if tile_b == b8 and b8 >= 16:
        tile_b = _round_up(pl.cdiv(b8, 2), 8)
    b_pad = _round_up(b8, tile_b)

    # No feature-dim padding: only pad batch rows when B isn't a tile multiple.
    x_p = x.astype(jnp.bfloat16)
    eps_p = eps.astype(jnp.float32)
    if b_pad != B:
        x_p = jnp.pad(x_p, ((0, b_pad - B), (0, 0)))
        eps_p = jnp.pad(eps_p, ((0, b_pad - B), (0, 0)))

    flat_params = []
    in_specs = [
        pl.BlockSpec((tile_b, x_dim), lambda i: (i, 0)),   # x tile (unpadded feat)
        pl.BlockSpec((tile_b, z_dim), lambda i: (i, 0)),   # eps tile (unpadded feat)
    ]
    for w, b in list(packed["hidden"]) + [packed["head"]]:
        flat_params += [w, b]
        # constant index_map -> weights/biases stay resident across batch tiles
        in_specs += [pl.BlockSpec(w.shape, lambda i: (0, 0)),
                     pl.BlockSpec(b.shape, lambda i: (0, 0))]

    out_shape = tuple(jax.ShapeDtypeStruct((b_pad, zp), jnp.float32)
                      for _ in range(3))
    out_specs = tuple(pl.BlockSpec((tile_b, zp), lambda i: (i, 0))
                      for _ in range(3))

    z_p, mu_p, lv_p = pl.pallas_call(
        _make_fused_encoder_kernel(n_hidden, z_dim),
        out_shape=out_shape,
        grid=(b_pad // tile_b,),
        in_specs=in_specs,
        out_specs=out_specs,
        compiler_params=pltpu.CompilerParams(
            dimension_semantics=("parallel",),
            # actual use is a few MiB even at tile_b=1024; 32 MiB is safe on
            # v5e/v6e (128 MiB) and v7x (64 MiB physical).
            vmem_limit_bytes=32 * 1024 * 1024,
        ),
    )(x_p, eps_p, *flat_params)

    # leading-column slices of 128-wide arrays (cheap contiguous copies)
    z = z_p[:B, :z_dim]
    mu = mu_p[:B, :z_dim]
    log_var = lv_p[:B, :z_dim]
    return z, mu, log_var


# ----------------------------- params --------------------------------------- #

def init_linear(key, fan_in, fan_out):
    # mimics PyTorch nn.Linear init (uniform +-1/sqrt(fan_in)); stored (in, out)
    kw, kb = jax.random.split(key)
    bound = 1.0 / math.sqrt(fan_in)
    w = jax.random.uniform(kw, (fan_in, fan_out), jnp.float32, -bound, bound)
    b = jax.random.uniform(kb, (1, fan_out), jnp.float32, -bound, bound)
    return w, b


def init_encoder_params(key, dims):
    """Unpadded f32 parameters (reference form)."""
    x_dim, h_dims, z_dim = dims
    layer_dims = [x_dim] + list(h_dims)
    params = {"hidden": []}
    for i in range(1, len(layer_dims)):
        key, sub = jax.random.split(key)
        params["hidden"].append(init_linear(sub, layer_dims[i - 1], layer_dims[i]))
    key, kmu, klv = jax.random.split(key, 3)
    params["mu"] = init_linear(kmu, layer_dims[-1], z_dim)
    params["log_var"] = init_linear(klv, layer_dims[-1], z_dim)
    return params


def pack_encoder_params(params, dims):
    """Pad OUTPUT feature dims to multiples of 128 (inputs follow the previous
    layer's padded width; the first layer keeps the true x_dim since x is fed
    unpadded), fuse mu/log_var heads, cast weights to bf16 (biases stay f32)."""
    x_dim, h_dims, z_dim = dims
    packed = {"hidden": [], "x_dim": x_dim, "z_dim": z_dim}

    in_p = x_dim
    for w, b in params["hidden"]:
        out_p = _round_up(w.shape[1], LANE)
        wp = jnp.pad(w, ((0, in_p - w.shape[0]),
                         (0, out_p - w.shape[1]))).astype(jnp.bfloat16)
        bp = jnp.pad(b, ((0, 0), (0, out_p - b.shape[1]))).astype(jnp.float32)
        packed["hidden"].append((wp, bp))
        in_p = out_p

    # NOTE(v6e/v7x): 128-wide hidden layers only half-fill the 256-wide MXU; the
    # model dims are fixed by the spec, so the lever used here is more M rows per
    # weight push (large tile_b) rather than resizing the layers.
    zp = _round_up(z_dim, LANE)
    packed["z_pad"] = zp
    wmu, bmu = params["mu"]
    wlv, blv = params["log_var"]
    wmu_p = jnp.pad(wmu, ((0, in_p - wmu.shape[0]), (0, zp - z_dim)))
    wlv_p = jnp.pad(wlv, ((0, in_p - wlv.shape[0]), (0, zp - z_dim)))
    w_head = jnp.concatenate([wmu_p, wlv_p], axis=1).astype(jnp.bfloat16)
    bmu_p = jnp.pad(bmu, ((0, 0), (0, zp - z_dim)))
    blv_p = jnp.pad(blv, ((0, 0), (0, zp - z_dim)))
    b_head = jnp.concatenate([bmu_p, blv_p], axis=1).astype(jnp.float32)
    packed["head"] = (w_head, b_head)
    return packed


# ----------------------------- reference ------------------------------------ #

def encoder_reference(params, x, eps):
    """Pure-JAX reference with the same bf16-matmul / f32-elementwise numerics."""
    h = x
    for w, b in params["hidden"]:
        y = jnp.dot(h.astype(jnp.bfloat16), w.astype(jnp.bfloat16),
                    preferred_element_type=jnp.float32) + b
        h = jnp.maximum(y, 0.0)
    wmu, bmu = params["mu"]
    wlv, blv = params["log_var"]
    hb = h.astype(jnp.bfloat16)
    mu = jnp.dot(hb, wmu.astype(jnp.bfloat16),
                 preferred_element_type=jnp.float32) + bmu
    lv = jnp.dot(hb, wlv.astype(jnp.bfloat16),
                 preferred_element_type=jnp.float32) + blv
    z = mu + jnp.exp(0.5 * lv) * eps
    return z, mu, lv


# ----------------------------- main ------------------------------------------ #

if __name__ == "__main__":
    key = jax.random.PRNGKey(0)

    # dims = [input_dim, [hidden_dims], latent_dim]
    dims = [32, [64, 64], 16]
    batch = 512  # -> tile_b=256, grid of 2 parallel steps (both TCs on v7x)

    k_params, k_x, k_eps = jax.random.split(key, 3)
    params = init_encoder_params(k_params, dims)
    packed = pack_encoder_params(params, dims)

    x = jax.random.normal(k_x, (batch, dims[0]), jnp.float32)
    # epsilon for the reparametrization trick (torch.randn equivalent),
    # generated deterministically on the host and consumed unpadded by the kernel.
    # TODO(synk): could be generated in-kernel via pltpu.prng_seed/prng_random_bits
    # to remove the eps DMA entirely, but that changes the RNG stream vs. the
    # host reference used for verification.
    eps = jax.random.normal(k_eps, (batch, dims[2]), jnp.float32)

    z, mu, log_var = encoder_forward(packed, x, eps)
    jax.block_until_ready((z, mu, log_var))

    # sanity check against the pure-JAX reference
    z_ref, mu_ref, lv_ref = encoder_reference(params, x, eps)

    assert z.shape == (batch, dims[2])
    assert jnp.allclose(mu, mu_ref, atol=1e-3, rtol=1e-3), "mu mismatch"
    assert jnp.allclose(log_var, lv_ref, atol=1e-3, rtol=1e-3), "log_var mismatch"
    assert jnp.allclose(z, z_ref, atol=1e-3, rtol=1e-3), "z mismatch"

    print("KERNEL_OK")
</pallas_src>

<mosaic_0001>
module attributes {stable_mosaic.version = 11 : i64} {
  func.func @kernel(%arg0: i32, %arg1: memref<256x32xbf16, #tpu.memory_space<vmem>>, %arg2: memref<256x16xf32, #tpu.memory_space<vmem>>, %arg3: memref<32x128xbf16, #tpu.memory_space<vmem>>, %arg4: memref<1x128xf32, #tpu.memory_space<vmem>>, %arg5: memref<128x128xbf16, #tpu.memory_space<vmem>>, %arg6: memref<1x128xf32, #tpu.memory_space<vmem>>, %arg7: memref<128x256xbf16, #tpu.memory_space<vmem>>, %arg8: memref<1x256xf32, #tpu.memory_space<vmem>>, %arg9: memref<256x128xf32, #tpu.memory_space<vmem>>, %arg10: memref<256x128xf32, #tpu.memory_space<vmem>>, %arg11: memref<256x128xf32, #tpu.memory_space<vmem>>) attributes {dimension_semantics = [#tpu.dimension_semantics<parallel>], iteration_bounds = array<i64: 2>, scalar_prefetch = 0 : i64, scratch_operands = 0 : i64, tpu.core_type = #tpu.core_type<tc>, window_params = [{transform_indices = @transform_0, window_bounds = array<i64: 256, 32>}, {transform_indices = @transform_1, window_bounds = array<i64: 256, 16>}, {pipeline_mode = #tpu.pipeline_mode<synchronous>, transform_indices = @transform_2, window_bounds = array<i64: 32, 128>}, {pipeline_mode = #tpu.pipeline_mode<synchronous>, transform_indices = @transform_3, window_bounds = array<i64: 1, 128>}, {pipeline_mode = #tpu.pipeline_mode<synchronous>, transform_indices = @transform_4, window_bounds = array<i64: 128, 128>}, {pipeline_mode = #tpu.pipeline_mode<synchronous>, transform_indices = @transform_5, window_bounds = array<i64: 1, 128>}, {pipeline_mode = #tpu.pipeline_mode<synchronous>, transform_indices = @transform_6, window_bounds = array<i64: 128, 256>}, {pipeline_mode = #tpu.pipeline_mode<synchronous>, transform_indices = @transform_7, window_bounds = array<i64: 1, 256>}, {transform_indices = @transform_8, window_bounds = array<i64: 256, 128>}, {transform_indices = @transform_9, window_bounds = array<i64: 256, 128>}, {transform_indices = @transform_10, window_bounds = array<i64: 256, 128>}]} {
    %c0 = arith.constant 0 : index
    %c0_0 = arith.constant 0 : index
    %0 = vector.load %arg1[%c0, %c0_0] : memref<256x32xbf16, #tpu.memory_space<vmem>>, vector<256x32xbf16>
    %c0_1 = arith.constant 0 : index
    %c0_2 = arith.constant 0 : index
    %1 = vector.load %arg3[%c0_1, %c0_2] : memref<32x128xbf16, #tpu.memory_space<vmem>>, vector<32x128xbf16>
    %c0_3 = arith.constant 0 : index
    %c0_4 = arith.constant 0 : index
    %2 = vector.load %arg4[%c0_3, %c0_4] : memref<1x128xf32, #tpu.memory_space<vmem>>, vector<1x128xf32>
    %cst = arith.constant dense<0.000000e+00> : vector<256x128xf32>
    %3 = tpu.matmul %0, %1, %cst {dimension_numbers = #tpu.dot_dimension_numbers<[1], [0], [0], [1], [0, 0, 1, 1], [], []>} : vector<256x32xbf16>, vector<32x128xbf16>, vector<256x128xf32> -> vector<256x128xf32>
    %4 = vector.broadcast %2 : vector<1x128xf32> to vector<256x128xf32>
    %5 = arith.addf %3, %4 : vector<256x128xf32>
    %cst_5 = arith.constant 0.000000e+00 : f32
    %6 = vector.broadcast %cst_5 : f32 to vector<256x128xf32>
    %7 = arith.maximumf %5, %6 : vector<256x128xf32>
    %8 = arith.truncf %7 : vector<256x128xf32> to vector<256x128xbf16>
    %c0_6 = arith.constant 0 : index
    %c0_7 = arith.constant 0 : index
    %9 = vector.load %arg5[%c0_6, %c0_7] : memref<128x128xbf16, #tpu.memory_space<vmem>>, vector<128x128xbf16>
    %c0_8 = arith.constant 0 : index
    %c0_9 = arith.constant 0 : index
    %10 = vector.load %arg6[%c0_8, %c0_9] : memref<1x128xf32, #tpu.memory_space<vmem>>, vector<1x128xf32>
    %cst_10 = arith.constant dense<0.000000e+00> : vector<256x128xf32>
    %11 = tpu.matmul %8, %9, %cst_10 {dimension_numbers = #tpu.dot_dimension_numbers<[1], [0], [0], [1], [0, 0, 1, 1], [], []>} : vector<256x128xbf16>, vector<128x128xbf16>, vector<256x128xf32> -> vector<256x128xf32>
    %12 = vector.broadcast %10 : vector<1x128xf32> to vector<256x128xf32>
    %13 = arith.addf %11, %12 : vector<256x128xf32>
    %cst_11 = arith.constant 0.000000e+00 : f32
    %14 = vector.broadcast %cst_11 : f32 to vector<256x128xf32>
    %15 = arith.maximumf %13, %14 : vector<256x128xf32>
    %16 = arith.truncf %15 : vector<256x128xf32> to vector<256x128xbf16>
    %c0_12 = arith.constant 0 : index
    %c0_13 = arith.constant 0 : index
    %17 = vector.load %arg7[%c0_12, %c0_13] : memref<128x256xbf16, #tpu.memory_space<vmem>>, vector<128x256xbf16>
    %c0_14 = arith.constant 0 : index
    %c0_15 = arith.constant 0 : index
    %18 = vector.load %arg8[%c0_14, %c0_15] : memref<1x256xf32, #tpu.memory_space<vmem>>, vector<1x256xf32>
    %cst_16 = arith.constant dense<0.000000e+00> : vector<256x256xf32>
    %19 = tpu.matmul %16, %17, %cst_16 {dimension_numbers = #tpu.dot_dimension_numbers<[1], [0], [0], [1], [0, 0, 1, 1], [], []>} : vector<256x128xbf16>, vector<128x256xbf16>, vector<256x256xf32> -> vector<256x256xf32>
    %20 = vector.broadcast %18 : vector<1x256xf32> to vector<256x256xf32>
    %21 = arith.addf %19, %20 : vector<256x256xf32>
    %22 = vector.extract_strided_slice %21 {offsets = [0, 0], sizes = [256, 128], strides = [1, 1]} : vector<256x256xf32> to vector<256x128xf32>
    %23 = vector.extract_strided_slice %21 {offsets = [0, 128], sizes = [256, 128], strides = [1, 1]} : vector<256x256xf32> to vector<256x128xf32>
    %c0_17 = arith.constant 0 : index
    %c0_18 = arith.constant 0 : index
    %24 = vector.load %arg2[%c0_17, %c0_18] : memref<256x16xf32, #tpu.memory_space<vmem>>, vector<256x16xf32>
    %cst_19 = arith.constant 0.000000e+00 : f32
    %25 = vector.broadcast %cst_19 : f32 to vector<256x112xf32>
    %26 = tpu.concatenate %24, %25 in 1 : vector<256x16xf32>, vector<256x112xf32> -> vector<256x128xf32>
    %cst_20 = arith.constant 5.000000e-01 : f32
    %27 = vector.broadcast %cst_20 : f32 to vector<256x128xf32>
    %28 = arith.mulf %27, %23 : vector<256x128xf32>
    %29 = math.exp %28 : vector<256x128xf32>
    %30 = arith.mulf %29, %26 : vector<256x128xf32>
    %31 = arith.addf %22, %30 : vector<256x128xf32>
    %c0_21 = arith.constant 0 : index
    %c0_22 = arith.constant 0 : index
    %32 = vector.load %arg9[%c0_21, %c0_22] : memref<256x128xf32, #tpu.memory_space<vmem>>, vector<256x128xf32>
    tpu.vector_store %arg9[%c0_21, %c0_22], %31 {strides = array<i32>} : memref<256x128xf32, #tpu.memory_space<vmem>>, vector<256x128xf32>,
    %c0_23 = arith.constant 0 : index
    %c0_24 = arith.constant 0 : index
    %33 = vector.load %arg10[%c0_23, %c0_24] : memref<256x128xf32, #tpu.memory_space<vmem>>, vector<256x128xf32>
    tpu.vector_store %arg10[%c0_23, %c0_24], %22 {strides = array<i32>} : memref<256x128xf32, #tpu.memory_space<vmem>>, vector<256x128xf32>,
    %c0_25 = arith.constant 0 : index
    %c0_26 = arith.constant 0 : index
    %34 = vector.load %arg11[%c0_25, %c0_26] : memref<256x128xf32, #tpu.memory_space<vmem>>, vector<256x128xf32>
    tpu.vector_store %arg11[%c0_25, %c0_26], %23 {strides = array<i32>} : memref<256x128xf32, #tpu.memory_space<vmem>>, vector<256x128xf32>,
    return
  }
  func.func @transform_0(%arg0: i32) -> (i32, i32) {
    %c0_i32 = arith.constant 0 : i32
    %c0_i32_0 = arith.constant 0 : i32
    return %arg0, %c0_i32 : i32, i32
  }
  func.func @transform_1(%arg0: i32) -> (i32, i32) {
    %c0_i32 = arith.constant 0 : i32
    %c0_i32_0 = arith.constant 0 : i32
    return %arg0, %c0_i32 : i32, i32
  }
  func.func @transform_2(%arg0: i32) -> (i32, i32) {
    %c0_i32 = arith.constant 0 : i32
    %c0_i32_0 = arith.constant 0 : i32
    %c0_i32_1 = arith.constant 0 : i32
    return %c0_i32, %c0_i32_0 : i32, i32
  }
  func.func @transform_3(%arg0: i32) -> (i32, i32) {
    %c0_i32 = arith.constant 0 : i32
    %c0_i32_0 = arith.constant 0 : i32
    %c0_i32_1 = arith.constant 0 : i32
    return %c0_i32, %c0_i32_0 : i32, i32
  }
  func.func @transform_4(%arg0: i32) -> (i32, i32) {
    %c0_i32 = arith.constant 0 : i32
    %c0_i32_0 = arith.constant 0 : i32
    %c0_i32_1 = arith.constant 0 : i32
    return %c0_i32, %c0_i32_0 : i32, i32
  }
  func.func @transform_5(%arg0: i32) -> (i32, i32) {
    %c0_i32 = arith.constant 0 : i32
    %c0_i32_0 = arith.constant 0 : i32
    %c0_i32_1 = arith.constant 0 : i32
    return %c0_i32, %c0_i32_0 : i32, i32
  }
  func.func @transform_6(%arg0: i32) -> (i32, i32) {
    %c0_i32 = arith.constant 0 : i32
    %c0_i32_0 = arith.constant 0 : i32
    %c0_i32_1 = arith.constant 0 : i32
    return %c0_i32, %c0_i32_0 : i32, i32
  }
  func.func @transform_7(%arg0: i32) -> (i32, i32) {
    %c0_i32 = arith.constant 0 : i32
    %c0_i32_0 = arith.constant 0 : i32
    %c0_i32_1 = arith.constant 0 : i32
    return %c0_i32, %c0_i32_0 : i32, i32
  }
  func.func @transform_8(%arg0: i32) -> (i32, i32) {
    %c0_i32 = arith.constant 0 : i32
    %c0_i32_0 = arith.constant 0 : i32
    return %arg0, %c0_i32 : i32, i32
  }
  func.func @transform_9(%arg0: i32) -> (i32, i32) {
    %c0_i32 = arith.constant 0 : i32
    %c0_i32_0 = arith.constant 0 : i32
    return %arg0, %c0_i32 : i32, i32
  }
  func.func @transform_10(%arg0: i32) -> (i32, i32) {
    %c0_i32 = arith.constant 0 : i32
    %c0_i32_0 = arith.constant 0 : i32
    return %arg0, %c0_i32 : i32, i32
  }
}

</mosaic_0001>

<llo_original>
// kernel: tpu_custom_call.1
$region0: #{tpu_custom_call.1}
  #allocation0 [shape = 'u32[]', space=smem, size = 0x4, offset = 0x4, fixed_abs, tag = 'smem constant byte address 0x4 - core index']
  #allocation1 [shape = 'u32[144,128]{1,0:T(1,128)}', space=vmem, size = 0x12000, scoped, tag = 'internal scratch']
  %s0 = inlined_call_operand.vmem [shape: bf16[512,32], index: 0, kind: input, shape index: {}]
  %s1 = inlined_call_operand.vmem [shape: f32[512,16], index: 1, kind: input, shape index: {}]
  %s2 = inlined_call_operand.vmem [shape: bf16[32,128], index: 2, kind: input, shape index: {}]
  %s3 = inlined_call_operand.vmem [shape: f32[1,128], index: 3, kind: input, shape index: {}]
  %s4 = inlined_call_operand.vmem [shape: bf16[128,128], index: 4, kind: input, shape index: {}]
  %s5 = inlined_call_operand.vmem [shape: f32[1,128], index: 5, kind: input, shape index: {}]
  %s6 = inlined_call_operand.vmem [shape: bf16[128,256], index: 6, kind: input, shape index: {}]
  %s7 = inlined_call_operand.vmem [shape: f32[1,256], index: 7, kind: input, shape index: {}]
  %s8 = inlined_call_operand.hbm [shape: f32[512,128], index: 8, kind: output, shape index: {0}]
  %s9 = inlined_call_operand.hbm [shape: f32[512,128], index: 9, kind: output, shape index: {1}]
  %s10 = inlined_call_operand.hbm [shape: f32[512,128], index: 10, kind: output, shape index: {2}]
  %11 = xla_tuple %s8, %s9, %s10
  %s12 = sld [smem:[#allocation0]]
  $region81: #{tpu_custom_call.1} parent=0
    _
  %s14 = ssub.s32 1, %s12
  %s15 = scalar_select 0, %s14, %s12
  $region1: #{tpu_custom_call.1} parent=0
    #allocation2 [shape = 'u8[262144]{0}', space=vmem, size = 0x40000, scoped, tag = 'output window, operand 0']
    #allocation3 [shape = 's32[2]{0}', space=sflag, size = 0x8, scoped, tag = 'scoped memory for tpu_custom_call.1']
    #allocation4 [shape = 'u8[262144]{0}', space=vmem, size = 0x40000, scoped, tag = 'output window, operand 1']
    #allocation5 [shape = 's32[2]{0}', space=sflag, size = 0x8, scoped, tag = 'scoped memory for tpu_custom_call.1']
    #allocation6 [shape = 'u8[262144]{0}', space=vmem, size = 0x40000, scoped, tag = 'output window, operand 2']
    %16 = vsyncpa [#allocation3], 0
    %s17 = scalar_lea.sflag [#allocation3], 1
    %18 = vsyncpa %s17, 0
    %19 = vsyncpa [#allocation5], 0
    %s20 = scalar_lea.sflag [#allocation5], 1
    %21 = vsyncpa %s20, 0
    loop: start=0, step=1, limit=4
    $region2: #{tpu_custom_call.1} parent=1 // loop_pre_header
      _
    $region3: #{tpu_custom_call.1} parent=1 // loop_header
      %s23 = sphi 0, %s27
      %p24 = scmp.ge.s32.totalorder %s23, 4
      %s33 = sphi 0, %s35
      %s36 = sphi 0, %s33
      %s37 = sphi 0, %s36
      %s53 = sphi 0, %s37
      %s59 = sphi 0, %s61
      %s62 = sphi 0, %s59
      %s63 = sphi 0, %s62
      %s79 = sphi 0, %s63
      %s83 = sphi 0, %s83
      %s85 = sphi 0, %s83
      %s86 = sphi 0, %s85
      %s100 = sphi 0, %s86
      %s104 = sphi 0, %s104
      %s106 = sphi 0, %s104
      %s107 = sphi 0, %s106
      %s121 = sphi 0, %s107
      %s125 = sphi 0, %s125
      %s127 = sphi 0, %s125
      %s128 = sphi 0, %s127
      %s142 = sphi 0, %s128
      %s146 = sphi 0, %s146
      %s148 = sphi 0, %s146
      %s149 = sphi 0, %s148
      %s163 = sphi 0, %s149
      %s167 = sphi 0, %s167
      %s169 = sphi 0, %s167
      %s170 = sphi 0, %s169
      %s184 = sphi 0, %s170
      %s188 = sphi 0, %s188
      %s190 = sphi 0, %s188
      %s191 = sphi 0, %s190
      %s205 = sphi 0, %s191
      %s211 = sphi 0, %s213
      %s214 = sphi 0, %s211
      %s215 = sphi 0, %s214
      %s231 = sphi 0, %s215
      %s237 = sphi 0, %s239
      %s240 = sphi 0, %s237
      %s241 = sphi 0, %s240
      %s257 = sphi 0, %s241
      %s263 = sphi 0, %s265
      %s266 = sphi 0, %s263
      %s267 = sphi 0, %s266
      %s283 = sphi 0, %s267
    $region4: #{tpu_custom_call.1} parent=1 // loop_header_branch
      %26 = sbr.rel (%p24) target = $region8
    $region5: #{tpu_custom_call.1} parent=1 // loop_body
      %s28 = ssub.s32 %s23, 1
      %s29 = ssub.s32 %s23, 2
      %s30 = sadd.s32 %s23, 1
      %s31 = ssub.s32 %s23, %s30
      %p32 = scmp.eq.s32.totalorder %s31, 0
      %s34 = sadd.s32 %s33, 1
      %s35 = scalar_select %p32, %s33, %s34
      %p38 = pneg %p32
      %p39 = scmp.eq.s32.totalorder %s23, 1
      %p40 = por %p38, %p39
      %p41 = scmp.ne.s32.totalorder %s33, %s36
      %p42 = scmp.eq.s32.totalorder %s23, 0
      %p43 = por %p41, %p42
      %p44 = scmp.ne.s32.totalorder %s33, %s36
      %p45 = scmp.eq.s32.totalorder %s28, 1
      %p46 = por %p44, %p45
      %p47 = scmp.ne.s32.totalorder %s36, %s37
      %p48 = scmp.eq.s32.totalorder %s28, 0
      %p49 = por %p47, %p48
      %p50 = scmp.ne.s32.totalorder %s36, %s37
      %p51 = scmp.eq.s32.totalorder %s29, 1
      %p52 = por %p50, %p51
      %p54 = scmp.ne.s32.totalorder %s37, %s53
      %p55 = scmp.eq.s32.totalorder %s29, 0
      %p56 = por %p54, %p55
      %s57 = ssub.s32 %s23, %s30
      %p58 = scmp.eq.s32.totalorder %s57, 0
      %s60 = sadd.s32 %s59, 1
      %s61 = scalar_select %p58, %s59, %s60
      %p64 = pneg %p58
      %p65 = scmp.eq.s32.totalorder %s23, 1
      %p66 = por %p64, %p65
      %p67 = scmp.ne.s32.totalorder %s59, %s62
      %p68 = scmp.eq.s32.totalorder %s23, 0
      %p69 = por %p67, %p68
      %p70 = scmp.ne.s32.totalorder %s59, %s62
      %p71 = scmp.eq.s32.totalorder %s28, 1
      %p72 = por %p70, %p71
      %p73 = scmp.ne.s32.totalorder %s62, %s63
      %p74 = scmp.eq.s32.totalorder %s28, 0
      %p75 = por %p73, %p74
      %p76 = scmp.ne.s32.totalorder %s62, %s63
      %p77 = scmp.eq.s32.totalorder %s29, 1
      %p78 = por %p76, %p77
      %p80 = scmp.ne.s32.totalorder %s63, %s79
      %p81 = scmp.eq.s32.totalorder %s29, 0
      %p82 = por %p80, %p81
      %s84 = sadd.s32 %s83, 1
      %p87 = scmp.eq.s32.totalorder %s23, 1
      %p88 = scmp.ne.s32.totalorder %s83, %s85
      %p89 = scmp.eq.s32.totalorder %s23, 0
      %p90 = por %p88, %p89
      %p91 = scmp.ne.s32.totalorder %s83, %s85
      %p92 = scmp.eq.s32.totalorder %s28, 1
      %p93 = por %p91, %p92
      %p94 = scmp.ne.s32.totalorder %s85, %s86
      %p95 = scmp.eq.s32.totalorder %s28, 0
      %p96 = por %p94, %p95
      %p97 = scmp.ne.s32.totalorder %s85, %s86
      %p98 = scmp.eq.s32.totalorder %s29, 1
      %p99 = por %p97, %p98
      %p101 = scmp.ne.s32.totalorder %s86, %s100
      %p102 = scmp.eq.s32.totalorder %s29, 0
      %p103 = por %p101, %p102
      %s105 = sadd.s32 %s104, 1
      %p108 = scmp.eq.s32.totalorder %s23, 1
      %p109 = scmp.ne.s32.totalorder %s104, %s106
      %p110 = scmp.eq.s32.totalorder %s23, 0
      %p111 = por %p109, %p110
      %p112 = scmp.ne.s32.totalorder %s104, %s106
      %p113 = scmp.eq.s32.totalorder %s28, 1
      %p114 = por %p112, %p113
      %p115 = scmp.ne.s32.totalorder %s106, %s107
      %p116 = scmp.eq.s32.totalorder %s28, 0
      %p117 = por %p115, %p116
      %p118 = scmp.ne.s32.totalorder %s106, %s107
      %p119 = scmp.eq.s32.totalorder %s29, 1
      %p120 = por %p118, %p119
      %p122 = scmp.ne.s32.totalorder %s107, %s121
      %p123 = scmp.eq.s32.totalorder %s29, 0
      %p124 = por %p122, %p123
      %s126 = sadd.s32 %s125, 1
      %p129 = scmp.eq.s32.totalorder %s23, 1
      %p130 = scmp.ne.s32.totalorder %s125, %s127
      %p131 = scmp.eq.s32.totalorder %s23, 0
      %p132 = por %p130, %p131
      %p133 = scmp.ne.s32.totalorder %s125, %s127
      %p134 = scmp.eq.s32.totalorder %s28, 1
      %p135 = por %p133, %p134
      %p136 = scmp.ne.s32.totalorder %s127, %s128
      %p137 = scmp.eq.s32.totalorder %s28, 0
      %p138 = por %p136, %p137
      %p139 = scmp.ne.s32.totalorder %s127, %s128
      %p140 = scmp.eq.s32.totalorder %s29, 1
      %p141 = por %p139, %p140
      %p143 = scmp.ne.s32.totalorder %s128, %s142
      %p144 = scmp.eq.s32.totalorder %s29, 0
      %p145 = por %p143, %p144
      %s147 = sadd.s32 %s146, 1
      %p150 = scmp.eq.s32.totalorder %s23, 1
      %p151 = scmp.ne.s32.totalorder %s146, %s148
      %p152 = scmp.eq.s32.totalorder %s23, 0
      %p153 = por %p151, %p152
      %p154 = scmp.ne.s32.totalorder %s146, %s148
      %p155 = scmp.eq.s32.totalorder %s28, 1
      %p156 = por %p154, %p155
      %p157 = scmp.ne.s32.totalorder %s148, %s149
      %p158 = scmp.eq.s32.totalorder %s28, 0
      %p159 = por %p157, %p158
      %p160 = scmp.ne.s32.totalorder %s148, %s149
      %p161 = scmp.eq.s32.totalorder %s29, 1
      %p162 = por %p160, %p161
      %p164 = scmp.ne.s32.totalorder %s149, %s163
      %p165 = scmp.eq.s32.totalorder %s29, 0
      %p166 = por %p164, %p165
      %s168 = sadd.s32 %s167, 1
      %p171 = scmp.eq.s32.totalorder %s23, 1
      %p172 = scmp.ne.s32.totalorder %s167, %s169
      %p173 = scmp.eq.s32.totalorder %s23, 0
      %p174 = por %p172, %p173
      %p175 = scmp.ne.s32.totalorder %s167, %s169
      %p176 = scmp.eq.s32.totalorder %s28, 1
      %p177 = por %p175, %p176
      %p178 = scmp.ne.s32.totalorder %s169, %s170
      %p179 = scmp.eq.s32.totalorder %s28, 0
      %p180 = por %p178, %p179
      %p181 = scmp.ne.s32.totalorder %s169, %s170
      %p182 = scmp.eq.s32.totalorder %s29, 1
      %p183 = por %p181, %p182
      %p185 = scmp.ne.s32.totalorder %s170, %s184
      %p186 = scmp.eq.s32.totalorder %s29, 0
      %p187 = por %p185, %p186
      %s189 = sadd.s32 %s188, 1
      %p192 = scmp.eq.s32.totalorder %s23, 1
      %p193 = scmp.ne.s32.totalorder %s188, %s190
      %p194 = scmp.eq.s32.totalorder %s23, 0
      %p195 = por %p193, %p194
      %p196 = scmp.ne.s32.totalorder %s188, %s190
      %p197 = scmp.eq.s32.totalorder %s28, 1
      %p198 = por %p196, %p197
      %p199 = scmp.ne.s32.totalorder %s190, %s191
      %p200 = scmp.eq.s32.totalorder %s28, 0
      %p201 = por %p199, %p200
      %p202 = scmp.ne.s32.totalorder %s190, %s191
      %p203 = scmp.eq.s32.totalorder %s29, 1
      %p204 = por %p202, %p203
      %p206 = scmp.ne.s32.totalorder %s191, %s205
      %p207 = scmp.eq.s32.totalorder %s29, 0
      %p208 = por %p206, %p207
      %s209 = ssub.s32 %s23, %s30
      %p210 = scmp.eq.s32.totalorder %s209, 0
      %s212 = sadd.s32 %s211, 1
      %s213 = scalar_select %p210, %s211, %s212
      %p216 = pneg %p210
      %p217 = scmp.eq.s32.totalorder %s23, 1
      %p218 = por %p216, %p217
      %p219 = scmp.ne.s32.totalorder %s211, %s214
      %p220 = scmp.eq.s32.totalorder %s23, 0
      %p221 = por %p219, %p220
      %p222 = scmp.ne.s32.totalorder %s211, %s214
      %p223 = scmp.eq.s32.totalorder %s28, 1
      %p224 = por %p222, %p223
      %p225 = scmp.ne.s32.totalorder %s214, %s215
      %p226 = scmp.eq.s32.totalorder %s28, 0
      %p227 = por %p225, %p226
      %p228 = scmp.ne.s32.totalorder %s214, %s215
      %p229 = scmp.eq.s32.totalorder %s29, 1
      %p230 = por %p228, %p229
      %p232 = scmp.ne.s32.totalorder %s215, %s231
      %p233 = scmp.eq.s32.totalorder %s29, 0
      %p234 = por %p232, %p233
      %s235 = ssub.s32 %s23, %s30
      %p236 = scmp.eq.s32.totalorder %s235, 0
      %s238 = sadd.s32 %s237, 1
      %s239 = scalar_select %p236, %s237, %s238
      %p242 = pneg %p236
      %p243 = scmp.eq.s32.totalorder %s23, 1
      %p244 = por %p242, %p243
      %p245 = scmp.ne.s32.totalorder %s237, %s240
      %p246 = scmp.eq.s32.totalorder %s23, 0
      %p247 = por %p245, %p246
      %p248 = scmp.ne.s32.totalorder %s237, %s240
      %p249 = scmp.eq.s32.totalorder %s28, 1
      %p250 = por %p248, %p249
      %p251 = scmp.ne.s32.totalorder %s240, %s241
      %p252 = scmp.eq.s32.totalorder %s28, 0
      %p253 = por %p251, %p252
      %p254 = scmp.ne.s32.totalorder %s240, %s241
      %p255 = scmp.eq.s32.totalorder %s29, 1
      %p256 = por %p254, %p255
      %p258 = scmp.ne.s32.totalorder %s241, %s257
      %p259 = scmp.eq.s32.totalorder %s29, 0
      %p260 = por %p258, %p259
      %s261 = ssub.s32 %s23, %s30
      %p262 = scmp.eq.s32.totalorder %s261, 0
      %s264 = sadd.s32 %s263, 1
      %s265 = scalar_select %p262, %s263, %s264
      %p268 = pneg %p262
      %p269 = scmp.eq.s32.totalorder %s23, 1
      %p270 = por %p268, %p269
      %p271 = scmp.ne.s32.totalorder %s263, %s266
      %p272 = scmp.eq.s32.totalorder %s23, 0
      %p273 = por %p271, %p272
      %p274 = scmp.ne.s32.totalorder %s263, %s266
      %p275 = scmp.eq.s32.totalorder %s28, 1
      %p276 = por %p274, %p275
      %p277 = scmp.ne.s32.totalorder %s266, %s267
      %p278 = scmp.eq.s32.totalorder %s28, 0
      %p279 = por %p277, %p278
      %p280 = scmp.ne.s32.totalorder %s266, %s267
      %p281 = scmp.eq.s32.totalorder %s29, 1
      %p282 = por %p280, %p281
      %p284 = scmp.ne.s32.totalorder %s267, %s283
      %p285 = scmp.eq.s32.totalorder %s29, 0
      %p286 = por %p284, %p285
      %p287 = scmp.le.s32.totalorder 1, %s23
      %p288 = scmp.lt.s32.totalorder %s23, 3
      %p289 = pnand %p287, %p288
      %p290 = pneg %p289
      // Predicated region
      $region9: #{tpu_custom_call.1} parent=5 // pred_check
        _
      $region10: #{tpu_custom_call.1} parent=5 // pred_check_branch
        %292 = sbr.rel (%p289) target = $region12
      $region11: #{tpu_custom_call.1} parent=5 // pred_region
        %s293 = ssub.s32 %s23, 1
        // Predicated region
        $region13: #{tpu_custom_call.1} parent=11 // pred_check
          %p294 = pneg %p96
        $region14: #{tpu_custom_call.1} parent=11 // pred_check_branch
          %296 = sbr.rel (%p294) target = $region16
        $region15: #{tpu_custom_call.1} parent=11 // pred_region
          _
        $region16: #{tpu_custom_call.1} parent=11 // pred_fallthru
          _
        // Predicated region
        $region17: #{tpu_custom_call.1} parent=11 // pred_check
          %p297 = pneg %p117
        $region18: #{tpu_custom_call.1} parent=11 // pred_check_branch
          %299 = sbr.rel (%p297) target = $region20
        $region19: #{tpu_custom_call.1} parent=11 // pred_region
          _
        $region20: #{tpu_custom_call.1} parent=11 // pred_fallthru
          _
        // Predicated region
        $region21: #{tpu_custom_call.1} parent=11 // pred_check
          %p300 = pneg %p138
        $region22: #{tpu_custom_call.1} parent=11 // pred_check_branch
          %302 = sbr.rel (%p300) target = $region24
        $region23: #{tpu_custom_call.1} parent=11 // pred_region
          _
        $region24: #{tpu_custom_call.1} parent=11 // pred_fallthru
          _
        // Predicated region
        $region25: #{tpu_custom_call.1} parent=11 // pred_check
          %p303 = pneg %p159
        $region26: #{tpu_custom_call.1} parent=11 // pred_check_branch
          %305 = sbr.rel (%p303) target = $region28
        $region27: #{tpu_custom_call.1} parent=11 // pred_region
          _
        $region28: #{tpu_custom_call.1} parent=11 // pred_fallthru
          _
        // Predicated region
        $region29: #{tpu_custom_call.1} parent=11 // pred_check
          %p306 = pneg %p180
        $region30: #{tpu_custom_call.1} parent=11 // pred_check_branch
          %308 = sbr.rel (%p306) target = $region32
        $region31: #{tpu_custom_call.1} parent=11 // pred_region
          _
        $region32: #{tpu_custom_call.1} parent=11 // pred_fallthru
          _
        // Predicated region
        $region33: #{tpu_custom_call.1} parent=11 // pred_check
          %p309 = pneg %p201
        $region34: #{tpu_custom_call.1} parent=11 // pred_check_branch
          %311 = sbr.rel (%p309) target = $region36
        $region35: #{tpu_custom_call.1} parent=11 // pred_region
          _
        $region36: #{tpu_custom_call.1} parent=11 // pred_fallthru
          _
      $region12: #{tpu_custom_call.1} parent=5 // pred_fallthru
        _
      %p312 = scmp.lt.s32.totalorder %s23, 2
      // Predicated region
      $region37: #{tpu_custom_call.1} parent=5 // pred_check
        %p313 = pneg %p312
      $region38: #{tpu_custom_call.1} parent=5 // pred_check_branch
        %315 = sbr.rel (%p313) target = $region40
      $region39: #{tpu_custom_call.1} parent=5 // pred_region
        // Predicated region
        $region41: #{tpu_custom_call.1} parent=39 // pred_check
          %p316 = pneg %p43
        $region42: #{tpu_custom_call.1} parent=39 // pred_check_branch
          %318 = sbr.rel (%p316) target = $region44
        $region43: #{tpu_custom_call.1} parent=39 // pred_region
          %s319 = smul.u32 32, %s23
          %p320 = scmp.lt.s32.totalorder %s319, 63
          %s321 = scalar_select %p320, %s319, 63
          %s322 = smul.addr %s321, 4
          %s323 = scalar_lea.vmem %s0, %s322
          %s324 = smul.u32 32, %s23
        $region44: #{tpu_custom_call.1} parent=39 // pred_fallthru
          _
        // Predicated region
        $region45: #{tpu_custom_call.1} parent=39 // pred_check
          %p325 = pneg %p69
        $region46: #{tpu_custom_call.1} parent=39 // pred_check_branch
          %327 = sbr.rel (%p325) target = $region48
        $region47: #{tpu_custom_call.1} parent=39 // pred_region
          %s328 = smul.u32 32, %s23
          %p329 = scmp.lt.s32.totalorder %s328, 63
          %s330 = scalar_select %p329, %s328, 63
          %s331 = smul.addr %s330, 8
          %s332 = scalar_lea.vmem %s1, %s331
          %s333 = smul.u32 32, %s23
        $region48: #{tpu_custom_call.1} parent=39 // pred_fallthru
          _
      $region40: #{tpu_custom_call.1} parent=5 // pred_fallthru
        _
      %p334 = scmp.le.s32.totalorder 1, %s23
      %p335 = scmp.lt.s32.totalorder %s23, 3
      %p336 = pnand %p334, %p335
      %p337 = pneg %p336
      // Predicated region
      $region49: #{tpu_custom_call.1} parent=5 // pred_check
        _
      $region50: #{tpu_custom_call.1} parent=5 // pred_check_branch
        %339 = sbr.rel (%p336) target = $region52
      $region51: #{tpu_custom_call.1} parent=5 // pred_region
        %s340 = ssub.s32 %s23, 1
        %s341 = smul.u32 32, %s28
        %p342 = scmp.lt.s32.totalorder %s341, 63
        %s343 = scalar_select %p342, %s341, 63
        %s344 = smul.addr %s343, 4
        %s345 = scalar_lea.vmem %s0, %s344
        %p346 = pneg %p49
        %p347 = pneg %p46
        %s348 = smul.u32 32, %s28
        %p349 = scmp.lt.s32.totalorder %s348, 63
        %s350 = scalar_select %p349, %s348, 63
        %s351 = smul.addr %s350, 8
        %s352 = scalar_lea.vmem %s1, %s351
        %p353 = pneg %p75
        %p354 = pneg %p72
        %p355 = pneg %p96
        %p356 = pneg %p93
        %p357 = pneg %p117
        %p358 = pneg %p114
        %p359 = pneg %p138
        %p360 = pneg %p135
        %p361 = pneg %p159
        %p362 = pneg %p156
        %p363 = pneg %p180
        %p364 = pneg %p177
        %p365 = pneg %p201
        %p366 = pneg %p198
        %p367 = pneg %p227
        %p368 = pneg %p224
        %s369 = sand.u32 %s214, 1
        %s370 = scalar_lea.sflag [#allocation3], %s369
        %s371 = sand.u32 %s214, 1
        %s372 = smul.addr %s371, 256
        %s373 = scalar_lea.vmem [#allocation2], %s372
        %p374 = pneg %p253
        %p375 = pneg %p250
        %s376 = sand.u32 %s28, 1
        %s377 = scalar_lea.sflag [#allocation5], %s376
        %s378 = sand.u32 %s240, 1
        %s379 = smul.addr %s378, 256
        %s380 = scalar_lea.vmem [#allocation4], %s379
        %p381 = pneg %p279
        %p382 = pneg %p276
        %s383 = sand.u32 %s28, 1
        %s384 = scalar_lea.sflag [#allocation5], %s383
        %s385 = sand.u32 %s266, 1
        %s386 = smul.addr %s385, 256
        %s387 = scalar_lea.vmem [#allocation6], %s386
        %s388 = smul.u32 32, %s28
        %p389 = scmp.lt.s32.totalorder %s388, 63
        %s390 = scalar_select %p389, %s388, 63
        %s391 = smul.addr %s390, 4
        %s392 = scalar_lea.vmem %s0, %s391
        %s393 = smul.u32 32, %s28
        %s394 = smul.u32 32, %s28
        %p395 = scmp.lt.s32.totalorder %s394, 63
        %s396 = scalar_select %p395, %s394, 63
        %s397 = smul.addr %s396, 8
        %s398 = scalar_lea.vmem %s1, %s397
        %s399 = smul.u32 32, %s28
        %s400 = smul.u32 32, %s28
        %s401 = smul.u32 32, %s28
        %s402 = smul.u32 32, %s28
        %v404 = vld [vmem:[%s392] sm:$0xf]
        %v405 = vld [vmem:[%s392 + $0x4] sm:$0xf]
        %v406 = vld [vmem:[%s392 + $0x8] sm:$0xf]
        %v407 = vld [vmem:[%s392 + $0xc] sm:$0xf]
        %v408 = vld [vmem:[%s392 + $0x10] sm:$0xf]
        %v409 = vld [vmem:[%s392 + $0x14] sm:$0xf]
        %v410 = vld [vmem:[%s392 + $0x18] sm:$0xf]
        %v411 = vld [vmem:[%s392 + $0x1c] sm:$0xf]
        %v412 = vld [vmem:[%s392 + $0x20] sm:$0xf]
        %v413 = vld [vmem:[%s392 + $0x24] sm:$0xf]
        %v414 = vld [vmem:[%s392 + $0x28] sm:$0xf]
        %v415 = vld [vmem:[%s392 + $0x2c] sm:$0xf]
        %v416 = vld [vmem:[%s392 + $0x30] sm:$0xf]
        %v417 = vld [vmem:[%s392 + $0x34] sm:$0xf]
        %v418 = vld [vmem:[%s392 + $0x38] sm:$0xf]
        %v419 = vld [vmem:[%s392 + $0x3c] sm:$0xf]
        %v420 = vld [vmem:[%s392 + $0x40] sm:$0xf]
        %v421 = vld [vmem:[%s392 + $0x44] sm:$0xf]
        %v422 = vld [vmem:[%s392 + $0x48] sm:$0xf]
        %v423 = vld [vmem:[%s392 + $0x4c] sm:$0xf]
        %v424 = vld [vmem:[%s392 + $0x50] sm:$0xf]
        %v425 = vld [vmem:[%s392 + $0x54] sm:$0xf]
        %v426 = vld [vmem:[%s392 + $0x58] sm:$0xf]
        %v427 = vld [vmem:[%s392 + $0x5c] sm:$0xf]
        %v428 = vld [vmem:[%s392 + $0x60] sm:$0xf]
        %v429 = vld [vmem:[%s392 + $0x64] sm:$0xf]
        %v430 = vld [vmem:[%s392 + $0x68] sm:$0xf]
        %v431 = vld [vmem:[%s392 + $0x6c] sm:$0xf]
        %v432 = vld [vmem:[%s392 + $0x70] sm:$0xf]
        %v433 = vld [vmem:[%s392 + $0x74] sm:$0xf]
        %v434 = vld [vmem:[%s392 + $0x78] sm:$0xf]
        %v435 = vld [vmem:[%s392 + $0x7c] sm:$0xf]
        %v436 = vld [vmem:[%s2] sm:$0xf]
        %v437 = vld [vmem:[%s2 + $0x4] sm:$0xf]
        %v438 = vld [vmem:[%s2 + $0x8] sm:$0xf]
        %v439 = vld [vmem:[%s2 + $0xc] sm:$0xf]
        %v440 = vld [vmem:[%s3] sm:$0x1]
        %v442 = vlaneseq
        %v443 = vshrl.u32 %v442, 7
        %v444 = vsub.s32 0, %v443
        %v445 = vrot.slane %v440, %v444
        %v479 = vunpack.c.l.b16 %v404
        %v480 = vunpack.c.l.b16 %v405
        %v481 = vunpack.c.l.b16 %v406
        %v482 = vunpack.c.l.b16 %v407
        %v483 = vunpack.c.l.b16 %v408
        %v484 = vunpack.c.l.b16 %v409
        %v485 = vunpack.c.l.b16 %v410
        %v486 = vunpack.c.l.b16 %v411
        %v487 = vunpack.c.l.b16 %v412
        %v488 = vunpack.c.l.b16 %v413
        %v489 = vunpack.c.l.b16 %v414
        %v490 = vunpack.c.l.b16 %v415
        %v491 = vunpack.c.l.b16 %v416
        %v492 = vunpack.c.l.b16 %v417
        %v493 = vunpack.c.l.b16 %v418
        %v494 = vunpack.c.l.b16 %v419
        %v495 = vunpack.c.l.b16 %v420
        %v496 = vunpack.c.l.b16 %v421
        %v497 = vunpack.c.l.b16 %v422
        %v498 = vunpack.c.l.b16 %v423
        %v499 = vunpack.c.l.b16 %v424
        %v500 = vunpack.c.l.b16 %v425
        %v501 = vunpack.c.l.b16 %v426
        %v502 = vunpack.c.l.b16 %v427
        %v503 = vunpack.c.l.b16 %v428
        %v504 = vunpack.c.l.b16 %v429
        %v505 = vunpack.c.l.b16 %v430
        %v506 = vunpack.c.l.b16 %v431
        %v507 = vunpack.c.l.b16 %v432
        %v508 = vunpack.c.l.b16 %v433
        %v509 = vunpack.c.l.b16 %v434
        %v510 = vunpack.c.l.b16 %v435
        %v511 = vpack.c.b16 %v480, %v479
        %v512 = vpack.c.b16 %v482, %v481
        %v513 = vpack.c.b16 %v484, %v483
        %v514 = vpack.c.b16 %v486, %v485
        %v515 = vpack.c.b16 %v488, %v487
        %v516 = vpack.c.b16 %v490, %v489
        %v517 = vpack.c.b16 %v492, %v491
        %v518 = vpack.c.b16 %v494, %v493
        %v519 = vpack.c.b16 %v496, %v495
        %v520 = vpack.c.b16 %v498, %v497
        %v521 = vpack.c.b16 %v500, %v499
        %v522 = vpack.c.b16 %v502, %v501
        %v523 = vpack.c.b16 %v504, %v503
        %v524 = vpack.c.b16 %v506, %v505
        %v525 = vpack.c.b16 %v508, %v507
        %v526 = vpack.c.b16 %v510, %v509
        %v531 = vunpack.c.l.b16 %v436
        %v532 = vunpack.c.l.b16 %v437
        %v533 = vunpack.c.l.b16 %v438
        %v534 = vunpack.c.l.b16 %v439
        %v535 = vpack.c.b16 %v532, %v531
        %v536 = vpack.c.b16 %v534, %v533
        %vm539 = vcmask 261120
        %v541 = vsel %vm539, %v511, 0
        %v544 = vsel %vm539, %v512, 0
        %v547 = vsel %vm539, %v513, 0
        %v550 = vsel %vm539, %v514, 0
        %v553 = vsel %vm539, %v515, 0
        %v556 = vsel %vm539, %v516, 0
        %v559 = vsel %vm539, %v517, 0
        %v562 = vsel %vm539, %v518, 0
        %v565 = vsel %vm539, %v519, 0
        %v568 = vsel %vm539, %v520, 0
        %v571 = vsel %vm539, %v521, 0
        %v574 = vsel %vm539, %v522, 0
        %v577 = vsel %vm539, %v523, 0
        %v580 = vsel %vm539, %v524, 0
        %v583 = vsel %vm539, %v525, 0
        %v586 = vsel %vm539, %v526, 0
        %588 = vmatprep.subr.bf16.mxu0 0
        %589 = vmatpush1.bf16.msra.mxu0 %v535
        %590 = vmatprep.subr.bf16.mxu0 0
        %591 = vmatpush1.bf16.msra.mxu0 %v536
        %592 = vmatprep.subr.bf16.mxu0 0
        %593 = vmatpush1.bf16.msra.mxu0 0
        %594 = vmatprep.subr.bf16.mxu0 0
        %595 = vmatpush1.bf16.msra.mxu0 0
        %596 = vmatprep.subr.bf16.mxu0 0
        %597 = vmatpush1.bf16.msra.mxu0 0
        %598 = vmatprep.subr.bf16.mxu0 0
        %599 = vmatpush1.bf16.msra.mxu0 0
        %600 = vmatprep.subr.bf16.mxu0 0
        %601 = vmatpush1.bf16.msra.mxu0 0
        %602 = vmatprep.subr.bf16.mxu0 0
        %603 = vmatpush1.bf16.msra.mxu0 0
        %604 = vmatprep.subr.bf16.mxu0 0
        %605 = vmatpush1.bf16.msra.mxu0 0
        %606 = vmatprep.subr.bf16.mxu0 0
        %607 = vmatpush1.bf16.msra.mxu0 0
        %608 = vmatprep.subr.bf16.mxu0 0
        %609 = vmatpush1.bf16.msra.mxu0 0
        %610 = vmatprep.subr.bf16.mxu0 0
        %611 = vmatpush1.bf16.msra.mxu0 0
        %612 = vmatprep.subr.bf16.mxu0 0
        %613 = vmatpush1.bf16.msra.mxu0 0
        %614 = vmatprep.subr.bf16.mxu0 0
        %615 = vmatpush1.bf16.msra.mxu0 0
        %616 = vmatprep.subr.bf16.mxu0 0
        %617 = vmatpush1.bf16.msra.mxu0 0
        %618 = vmatprep.subr.bf16.mxu0 0
        %619 = vmatpush1.bf16.msra.mxu0 0
        %620 = vmatprep.mubr.bf16.mxu0 0
        %621 = vmatmul.mubr.bf16.gmra.mrb[0].mxu0 %v541
        %v622 = vpop.f32.mrb[0].mxu0
        %v623 = vadd.f32 %v445, %v622
        %v624 = vpop.f32.mrb[0].mxu0
        %v625 = vpop.f32.mrb[0].mxu0
        %v626 = vadd.f32 %v445, %v625
        %v627 = vpop.f32.mrb[0].mxu0
        %628 = vmatprep.mubr.bf16.mxu0 0
        %629 = vmatmul.mubr.bf16.gmra.mrb[0].mxu0 %v544
        %v630 = vpop.f32.mrb[0].mxu0
        %v631 = vadd.f32 %v445, %v630
        %v632 = vpop.f32.mrb[0].mxu0
        %v633 = vpop.f32.mrb[0].mxu0
        %v634 = vadd.f32 %v445, %v633
        %v635 = vpop.f32.mrb[0].mxu0
        %636 = vmatprep.mubr.bf16.mxu0 0
        %637 = vmatmul.mubr.bf16.gmra.mrb[0].mxu0 %v547
        %v638 = vpop.f32.mrb[0].mxu0
        %v639 = vadd.f32 %v445, %v638
        %v640 = vpop.f32.mrb[0].mxu0
        %v641 = vpop.f32.mrb[0].mxu0
        %v642 = vadd.f32 %v445, %v641
        %v643 = vpop.f32.mrb[0].mxu0
        %644 = vmatprep.mubr.bf16.mxu0 0
        %645 = vmatmul.mubr.bf16.gmra.mrb[0].mxu0 %v550
        %v646 = vpop.f32.mrb[0].mxu0
        %v647 = vadd.f32 %v445, %v646
        %v648 = vpop.f32.mrb[0].mxu0
        %v649 = vpop.f32.mrb[0].mxu0
        %v650 = vadd.f32 %v445, %v649
        %v651 = vpop.f32.mrb[0].mxu0
        %652 = vmatprep.mubr.bf16.mxu0 0
        %653 = vmatmul.mubr.bf16.gmra.mrb[0].mxu0 %v553
        %v654 = vpop.f32.mrb[0].mxu0
        %v655 = vadd.f32 %v445, %v654
        %v656 = vpop.f32.mrb[0].mxu0
        %v657 = vpop.f32.mrb[0].mxu0
        %v658 = vadd.f32 %v445, %v657
        %v659 = vpop.f32.mrb[0].mxu0
        %660 = vmatprep.mubr.bf16.mxu0 0
        %661 = vmatmul.mubr.bf16.gmra.mrb[0].mxu0 %v556
        %v662 = vpop.f32.mrb[0].mxu0
        %v663 = vadd.f32 %v445, %v662
        %v664 = vpop.f32.mrb[0].mxu0
        %v665 = vpop.f32.mrb[0].mxu0
        %v666 = vadd.f32 %v445, %v665
        %v667 = vpop.f32.mrb[0].mxu0
        %668 = vmatprep.mubr.bf16.mxu0 0
        %669 = vmatmul.mubr.bf16.gmra.mrb[0].mxu0 %v559
        %v670 = vpop.f32.mrb[0].mxu0
        %v671 = vadd.f32 %v445, %v670
        %v672 = vpop.f32.mrb[0].mxu0
        %v673 = vpop.f32.mrb[0].mxu0
        %v674 = vadd.f32 %v445, %v673
        %v675 = vpop.f32.mrb[0].mxu0
        %676 = vmatprep.mubr.bf16.mxu0 0
        %677 = vmatmul.mubr.bf16.gmra.mrb[0].mxu0 %v562
        %v678 = vpop.f32.mrb[0].mxu0
        %v679 = vadd.f32 %v445, %v678
        %v680 = vpop.f32.mrb[0].mxu0
        %v681 = vpop.f32.mrb[0].mxu0
        %v682 = vadd.f32 %v445, %v681
        %v683 = vpop.f32.mrb[0].mxu0
        %684 = vmatprep.mubr.bf16.mxu0 0
        %685 = vmatmul.mubr.bf16.gmra.mrb[0].mxu0 %v565
        %v686 = vpop.f32.mrb[0].mxu0
        %v687 = vadd.f32 %v445, %v686
        %v688 = vpop.f32.mrb[0].mxu0
        %v689 = vpop.f32.mrb[0].mxu0
        %v690 = vadd.f32 %v445, %v689
        %v691 = vpop.f32.mrb[0].mxu0
        %692 = vmatprep.mubr.bf16.mxu0 0
        %693 = vmatmul.mubr.bf16.gmra.mrb[0].mxu0 %v568
        %v694 = vpop.f32.mrb[0].mxu0
        %v695 = vadd.f32 %v445, %v694
        %v696 = vpop.f32.mrb[0].mxu0
        %v697 = vpop.f32.mrb[0].mxu0
        %v698 = vadd.f32 %v445, %v697
        %v699 = vpop.f32.mrb[0].mxu0
        %700 = vmatprep.mubr.bf16.mxu0 0
        %701 = vmatmul.mubr.bf16.gmra.mrb[0].mxu0 %v571
        %v702 = vpop.f32.mrb[0].mxu0
        %v703 = vadd.f32 %v445, %v702
        %v704 = vpop.f32.mrb[0].mxu0
        %v705 = vpop.f32.mrb[0].mxu0
        %v706 = vadd.f32 %v445, %v705
        %v707 = vpop.f32.mrb[0].mxu0
        %708 = vmatprep.mubr.bf16.mxu0 0
        %709 = vmatmul.mubr.bf16.gmra.mrb[0].mxu0 %v574
        %v710 = vpop.f32.mrb[0].mxu0
        %v711 = vadd.f32 %v445, %v710
        %v712 = vpop.f32.mrb[0].mxu0
        %v713 = vpop.f32.mrb[0].mxu0
        %v714 = vadd.f32 %v445, %v713
        %v715 = vpop.f32.mrb[0].mxu0
        %716 = vmatprep.mubr.bf16.mxu0 0
        %717 = vmatmul.mubr.bf16.gmra.mrb[0].mxu0 %v577
        %v718 = vpop.f32.mrb[0].mxu0
        %v719 = vadd.f32 %v445, %v718
        %v720 = vpop.f32.mrb[0].mxu0
        %v721 = vpop.f32.mrb[0].mxu0
        %v722 = vadd.f32 %v445, %v721
        %v723 = vpop.f32.mrb[0].mxu0
        %724 = vmatprep.mubr.bf16.mxu0 0
        %725 = vmatmul.mubr.bf16.gmra.mrb[0].mxu0 %v580
        %v726 = vpop.f32.mrb[0].mxu0
        %v727 = vadd.f32 %v445, %v726
        %v728 = vpop.f32.mrb[0].mxu0
        %v729 = vpop.f32.mrb[0].mxu0
        %v730 = vadd.f32 %v445, %v729
        %v731 = vpop.f32.mrb[0].mxu0
        %732 = vmatprep.mubr.bf16.mxu0 0
        %733 = vmatmul.mubr.bf16.gmra.mrb[0].mxu0 %v583
        %v734 = vpop.f32.mrb[0].mxu0
        %v735 = vadd.f32 %v445, %v734
        %v736 = vpop.f32.mrb[0].mxu0
        %v737 = vpop.f32.mrb[0].mxu0
        %v738 = vadd.f32 %v445, %v737
        %v739 = vpop.f32.mrb[0].mxu0
        %740 = vmatprep.mubr.bf16.mxu0 0
        %741 = vmatmul.mubr.bf16.gmra.mrb[0].mxu0 %v586
        %v742 = vpop.f32.mrb[0].mxu0
        %v743 = vadd.f32 %v445, %v742
        %v744 = vpop.f32.mrb[0].mxu0
        %v745 = vpop.f32.mrb[0].mxu0
        %v746 = vadd.f32 %v445, %v745
        %v747 = vpop.f32.mrb[0].mxu0
        %748 = vdwg.mxu0
        %v749 = vmax.f32 %v623, 0.0
        %v750 = vmax.f32 %v626, 0.0
        %v751 = vmax.f32 %v631, 0.0
        %v752 = vmax.f32 %v634, 0.0
        %v753 = vmax.f32 %v639, 0.0
        %v754 = vmax.f32 %v642, 0.0
        %v755 = vmax.f32 %v647, 0.0
        %v756 = vmax.f32 %v650, 0.0
        %v757 = vmax.f32 %v655, 0.0
        %v758 = vmax.f32 %v658, 0.0
        %v759 = vmax.f32 %v663, 0.0
        %v760 = vmax.f32 %v666, 0.0
        %v761 = vmax.f32 %v671, 0.0
        %v762 = vmax.f32 %v674, 0.0
        %v763 = vmax.f32 %v679, 0.0
        %v764 = vmax.f32 %v682, 0.0
        %v765 = vmax.f32 %v687, 0.0
        %v766 = vmax.f32 %v690, 0.0
        %v767 = vmax.f32 %v695, 0.0
        %v768 = vmax.f32 %v698, 0.0
        %v769 = vmax.f32 %v703, 0.0
        %v770 = vmax.f32 %v706, 0.0
        %v771 = vmax.f32 %v711, 0.0
        %v772 = vmax.f32 %v714, 0.0
        %v773 = vmax.f32 %v719, 0.0
        %v774 = vmax.f32 %v722, 0.0
        %v775 = vmax.f32 %v727, 0.0
        %v776 = vmax.f32 %v730, 0.0
        %v777 = vmax.f32 %v735, 0.0
        %v778 = vmax.f32 %v738, 0.0
        %v779 = vmax.f32 %v743, 0.0
        %v780 = vmax.f32 %v746, 0.0
        %v781 = vpack.c.bf16 %v750, %v749
        %v782 = vpack.c.bf16 %v752, %v751
        %v783 = vpack.c.bf16 %v754, %v753
        %v784 = vpack.c.bf16 %v756, %v755
        %v785 = vpack.c.bf16 %v758, %v757
        %v786 = vpack.c.bf16 %v760, %v759
        %v787 = vpack.c.bf16 %v762, %v761
        %v788 = vpack.c.bf16 %v764, %v763
        %v789 = vpack.c.bf16 %v766, %v765
        %v790 = vpack.c.bf16 %v768, %v767
        %v791 = vpack.c.bf16 %v770, %v769
        %v792 = vpack.c.bf16 %v772, %v771
        %v793 = vpack.c.bf16 %v774, %v773
        %v794 = vpack.c.bf16 %v776, %v775
        %v795 = vpack.c.bf16 %v778, %v777
        %v796 = vpack.c.bf16 %v780, %v779
        %v797 = vld [vmem:[%s4] sm:$0xf]
        %v798 = vld [vmem:[%s4 + $0x4] sm:$0xf]
        %v799 = vld [vmem:[%s4 + $0x8] sm:$0xf]
        %v800 = vld [vmem:[%s4 + $0xc] sm:$0xf]
        %v801 = vld [vmem:[%s4 + $0x10] sm:$0xf]
        %v802 = vld [vmem:[%s4 + $0x14] sm:$0xf]
        %v803 = vld [vmem:[%s4 + $0x18] sm:$0xf]
        %v804 = vld [vmem:[%s4 + $0x1c] sm:$0xf]
        %v805 = vld [vmem:[%s4 + $0x20] sm:$0xf]
        %v806 = vld [vmem:[%s4 + $0x24] sm:$0xf]
        %v807 = vld [vmem:[%s4 + $0x28] sm:$0xf]
        %v808 = vld [vmem:[%s4 + $0x2c] sm:$0xf]
        %v809 = vld [vmem:[%s4 + $0x30] sm:$0xf]
        %v810 = vld [vmem:[%s4 + $0x34] sm:$0xf]
        %v811 = vld [vmem:[%s4 + $0x38] sm:$0xf]
        %v812 = vld [vmem:[%s4 + $0x3c] sm:$0xf]
        %v813 = vld [vmem:[%s5] sm:$0x1]
        %v815 = vlaneseq
        %v816 = vshrl.u32 %v815, 7
        %v817 = vsub.s32 0, %v816
        %v818 = vrot.slane %v813, %v817
        %v836 = vunpack.c.l.b16 %v797
        %v837 = vunpack.c.l.b16 %v798
        %v838 = vunpack.c.l.b16 %v799
        %v839 = vunpack.c.l.b16 %v800
        %v840 = vunpack.c.l.b16 %v801
        %v841 = vunpack.c.l.b16 %v802
        %v842 = vunpack.c.l.b16 %v803
        %v843 = vunpack.c.l.b16 %v804
        %v844 = vunpack.c.l.b16 %v805
        %v845 = vunpack.c.l.b16 %v806
        %v846 = vunpack.c.l.b16 %v807
        %v847 = vunpack.c.l.b16 %v808
        %v848 = vunpack.c.l.b16 %v809
        %v849 = vunpack.c.l.b16 %v810
        %v850 = vunpack.c.l.b16 %v811
        %v851 = vunpack.c.l.b16 %v812
        %v852 = vpack.c.b16 %v837, %v836
        %v853 = vpack.c.b16 %v839, %v838
        %v854 = vpack.c.b16 %v841, %v840
        %v855 = vpack.c.b16 %v843, %v842
        %v856 = vpack.c.b16 %v845, %v844
        %v857 = vpack.c.b16 %v847, %v846
        %v858 = vpack.c.b16 %v849, %v848
        %v859 = vpack.c.b16 %v851, %v850
        %868 = vmatprep.subr.bf16.mxu0 0
        %869 = vmatpush1.bf16.msra.mxu0 %v852
        %870 = vmatprep.subr.bf16.mxu0 0
        %871 = vmatpush1.bf16.msra.mxu0 %v853
        %872 = vmatprep.subr.bf16.mxu0 0
        %873 = vmatpush1.bf16.msra.mxu0 %v854
        %874 = vmatprep.subr.bf16.mxu0 0
        %875 = vmatpush1.bf16.msra.mxu0 %v855
        %876 = vmatprep.subr.bf16.mxu0 0
        %877 = vmatpush1.bf16.msra.mxu0 %v856
        %878 = vmatprep.subr.bf16.mxu0 0
        %879 = vmatpush1.bf16.msra.mxu0 %v857
        %880 = vmatprep.subr.bf16.mxu0 0
        %881 = vmatpush1.bf16.msra.mxu0 %v858
        %882 = vmatprep.subr.bf16.mxu0 0
        %883 = vmatpush1.bf16.msra.mxu0 %v859
        %884 = vmatprep.subr.bf16.mxu0 0
        %885 = vmatpush1.bf16.msra.mxu0 0
        %886 = vmatprep.subr.bf16.mxu0 0
        %887 = vmatpush1.bf16.msra.mxu0 0
        %888 = vmatprep.subr.bf16.mxu0 0
        %889 = vmatpush1.bf16.msra.mxu0 0
        %890 = vmatprep.subr.bf16.mxu0 0
        %891 = vmatpush1.bf16.msra.mxu0 0
        %892 = vmatprep.subr.bf16.mxu0 0
        %893 = vmatpush1.bf16.msra.mxu0 0
        %894 = vmatprep.subr.bf16.mxu0 0
        %895 = vmatpush1.bf16.msra.mxu0 0
        %896 = vmatprep.subr.bf16.mxu0 0
        %897 = vmatpush1.bf16.msra.mxu0 0
        %898 = vmatprep.subr.bf16.mxu0 0
        %899 = vmatpush1.bf16.msra.mxu0 0
        %900 = vmatprep.mubr.bf16.mxu0 0
        %901 = vmatmul.mubr.bf16.gmra.mrb[0].mxu0 %v781
        %v902 = vpop.f32.mrb[0].mxu0
        %v903 = vadd.f32 %v818, %v902
        %v904 = vpop.f32.mrb[0].mxu0
        %v905 = vpop.f32.mrb[0].mxu0
        %v906 = vadd.f32 %v818, %v905
        %v907 = vpop.f32.mrb[0].mxu0
        %908 = vmatprep.mubr.bf16.mxu0 0
        %909 = vmatmul.mubr.bf16.gmra.mrb[0].mxu0 %v782
        %v910 = vpop.f32.mrb[0].mxu0
        %v911 = vadd.f32 %v818, %v910
        %v912 = vpop.f32.mrb[0].mxu0
        %v913 = vpop.f32.mrb[0].mxu0
        %v914 = vadd.f32 %v818, %v913
        %v915 = vpop.f32.mrb[0].mxu0
        %916 = vmatprep.mubr.bf16.mxu0 0
        %917 = vmatmul.mubr.bf16.gmra.mrb[0].mxu0 %v783
        %v918 = vpop.f32.mrb[0].mxu0
        %v919 = vadd.f32 %v818, %v918
        %v920 = vpop.f32.mrb[0].mxu0
        %v921 = vpop.f32.mrb[0].mxu0
        %v922 = vadd.f32 %v818, %v921
        %v923 = vpop.f32.mrb[0].mxu0
        %924 = vmatprep.mubr.bf16.mxu0 0
        %925 = vmatmul.mubr.bf16.gmra.mrb[0].mxu0 %v784
        %v926 = vpop.f32.mrb[0].mxu0
        %v927 = vadd.f32 %v818, %v926
        %v928 = vpop.f32.mrb[0].mxu0
        %v929 = vpop.f32.mrb[0].mxu0
        %v930 = vadd.f32 %v818, %v929
        %v931 = vpop.f32.mrb[0].mxu0
        %932 = vmatprep.mubr.bf16.mxu0 0
        %933 = vmatmul.mubr.bf16.gmra.mrb[0].mxu0 %v785
        %v934 = vpop.f32.mrb[0].mxu0
        %v935 = vadd.f32 %v818, %v934
        %v936 = vpop.f32.mrb[0].mxu0
        %v937 = vpop.f32.mrb[0].mxu0
        %v938 = vadd.f32 %v818, %v937
        %v939 = vpop.f32.mrb[0].mxu0
        %940 = vmatprep.mubr.bf16.mxu0 0
        %941 = vmatmul.mubr.bf16.gmra.mrb[0].mxu0 %v786
        %v942 = vpop.f32.mrb[0].mxu0
        %v943 = vadd.f32 %v818, %v942
        %v944 = vpop.f32.mrb[0].mxu0
        %v945 = vpop.f32.mrb[0].mxu0
        %v946 = vadd.f32 %v818, %v945
        %v947 = vpop.f32.mrb[0].mxu0
        %948 = vmatprep.mubr.bf16.mxu0 0
        %949 = vmatmul.mubr.bf16.gmra.mrb[0].mxu0 %v787
        %v950 = vpop.f32.mrb[0].mxu0
        %v951 = vadd.f32 %v818, %v950
        %v952 = vpop.f32.mrb[0].mxu0
        %v953 = vpop.f32.mrb[0].mxu0
        %v954 = vadd.f32 %v818, %v953
        %v955 = vpop.f32.mrb[0].mxu0
        %956 = vmatprep.mubr.bf16.mxu0 0
        %957 = vmatmul.mubr.bf16.gmra.mrb[0].mxu0 %v788
        %v958 = vpop.f32.mrb[0].mxu0
        %v959 = vadd.f32 %v818, %v958
        %v960 = vpop.f32.mrb[0].mxu0
        %v961 = vpop.f32.mrb[0].mxu0
        %v962 = vadd.f32 %v818, %v961
        %v963 = vpop.f32.mrb[0].mxu0
        %964 = vmatprep.mubr.bf16.mxu0 0
        %965 = vmatmul.mubr.bf16.gmra.mrb[0].mxu0 %v789
        %v966 = vpop.f32.mrb[0].mxu0
        %v967 = vadd.f32 %v818, %v966
        %v968 = vpop.f32.mrb[0].mxu0
        %v969 = vpop.f32.mrb[0].mxu0
        %v970 = vadd.f32 %v818, %v969
        %v971 = vpop.f32.mrb[0].mxu0
        %972 = vmatprep.mubr.bf16.mxu0 0
        %973 = vmatmul.mubr.bf16.gmra.mrb[0].mxu0 %v790
        %v974 = vpop.f32.mrb[0].mxu0
        %v975 = vadd.f32 %v818, %v974
        %v976 = vpop.f32.mrb[0].mxu0
        %v977 = vpop.f32.mrb[0].mxu0
        %v978 = vadd.f32 %v818, %v977
        %v979 = vpop.f32.mrb[0].mxu0
        %980 = vmatprep.mubr.bf16.mxu0 0
        %981 = vmatmul.mubr.bf16.gmra.mrb[0].mxu0 %v791
        %v982 = vpop.f32.mrb[0].mxu0
        %v983 = vadd.f32 %v818, %v982
        %v984 = vpop.f32.mrb[0].mxu0
        %v985 = vpop.f32.mrb[0].mxu0
        %v986 = vadd.f32 %v818, %v985
        %v987 = vpop.f32.mrb[0].mxu0
        %988 = vmatprep.mubr.bf16.mxu0 0
        %989 = vmatmul.mubr.bf16.gmra.mrb[0].mxu0 %v792
        %v990 = vpop.f32.mrb[0].mxu0
        %v991 = vadd.f32 %v818, %v990
        %v992 = vpop.f32.mrb[0].mxu0
        %v993 = vpop.f32.mrb[0].mxu0
        %v994 = vadd.f32 %v818, %v993
        %v995 = vpop.f32.mrb[0].mxu0
        %996 = vmatprep.mubr.bf16.mxu0 0
        %997 = vmatmul.mubr.bf16.gmra.mrb[0].mxu0 %v793
        %v998 = vpop.f32.mrb[0].mxu0
        %v999 = vadd.f32 %v818, %v998
        %v1000 = vpop.f32.mrb[0].mxu0
        %v1001 = vpop.f32.mrb[0].mxu0
        %v1002 = vadd.f32 %v818, %v1001
        %v1003 = vpop.f32.mrb[0].mxu0
        %1004 = vmatprep.mubr.bf16.mxu0 0
        %1005 = vmatmul.mubr.bf16.gmra.mrb[0].mxu0 %v794
        %v1006 = vpop.f32.mrb[0].mxu0
        %v1007 = vadd.f32 %v818, %v1006
        %v1008 = vpop.f32.mrb[0].mxu0
        %v1009 = vpop.f32.mrb[0].mxu0
        %v1010 = vadd.f32 %v818, %v1009
        %v1011 = vpop.f32.mrb[0].mxu0
        %1012 = vmatprep.mubr.bf16.mxu0 0
        %1013 = vmatmul.mubr.bf16.gmra.mrb[0].mxu0 %v795
        %v1014 = vpop.f32.mrb[0].mxu0
        %v1015 = vadd.f32 %v818, %v1014
        %v1016 = vpop.f32.mrb[0].mxu0
        %v1017 = vpop.f32.mrb[0].mxu0
        %v1018 = vadd.f32 %v818, %v1017
        %v1019 = vpop.f32.mrb[0].mxu0
        %1020 = vmatprep.mubr.bf16.mxu0 0
        %1021 = vmatmul.mubr.bf16.gmra.mrb[0].mxu0 %v796
        %v1022 = vpop.f32.mrb[0].mxu0
        %v1023 = vadd.f32 %v818, %v1022
        %v1024 = vpop.f32.mrb[0].mxu0
        %v1025 = vpop.f32.mrb[0].mxu0
        %v1026 = vadd.f32 %v818, %v1025
        %v1027 = vpop.f32.mrb[0].mxu0
        %1028 = vdwg.mxu0
        %v1029 = vmax.f32 %v903, 0.0
        %v1030 = vmax.f32 %v906, 0.0
        %v1031 = vmax.f32 %v911, 0.0
        %v1032 = vmax.f32 %v914, 0.0
        %v1033 = vmax.f32 %v919, 0.0
        %v1034 = vmax.f32 %v922, 0.0
        %v1035 = vmax.f32 %v927, 0.0
        %v1036 = vmax.f32 %v930, 0.0
        %v1037 = vmax.f32 %v935, 0.0
        %v1038 = vmax.f32 %v938, 0.0
        %v1039 = vmax.f32 %v943, 0.0
        %v1040 = vmax.f32 %v946, 0.0
        %v1041 = vmax.f32 %v951, 0.0
        %v1042 = vmax.f32 %v954, 0.0
        %v1043 = vmax.f32 %v959, 0.0
        %v1044 = vmax.f32 %v962, 0.0
        %v1045 = vmax.f32 %v967, 0.0
        %v1046 = vmax.f32 %v970, 0.0
        %v1047 = vmax.f32 %v975, 0.0
        %v1048 = vmax.f32 %v978, 0.0
        %v1049 = vmax.f32 %v983, 0.0
        %v1050 = vmax.f32 %v986, 0.0
        %v1051 = vmax.f32 %v991, 0.0
        %v1052 = vmax.f32 %v994, 0.0
        %v1053 = vmax.f32 %v999, 0.0
        %v1054 = vmax.f32 %v1002, 0.0
        %v1055 = vmax.f32 %v1007, 0.0
        %v1056 = vmax.f32 %v1010, 0.0
        %v1057 = vmax.f32 %v1015, 0.0
        %v1058 = vmax.f32 %v1018, 0.0
        %v1059 = vmax.f32 %v1023, 0.0
        %v1060 = vmax.f32 %v1026, 0.0
        %v1061 = vpack.c.bf16 %v1030, %v1029
        %v1062 = vpack.c.bf16 %v1032, %v1031
        %v1063 = vpack.c.bf16 %v1034, %v1033
        %v1064 = vpack.c.bf16 %v1036, %v1035
        %v1065 = vpack.c.bf16 %v1038, %v1037
        %v1066 = vpack.c.bf16 %v1040, %v1039
        %v1067 = vpack.c.bf16 %v1042, %v1041
        %v1068 = vpack.c.bf16 %v1044, %v1043
        %v1069 = vpack.c.bf16 %v1046, %v1045
        %v1070 = vpack.c.bf16 %v1048, %v1047
        %v1071 = vpack.c.bf16 %v1050, %v1049
        %v1072 = vpack.c.bf16 %v1052, %v1051
        %v1073 = vpack.c.bf16 %v1054, %v1053
        %v1074 = vpack.c.bf16 %v1056, %v1055
        %v1075 = vpack.c.bf16 %v1058, %v1057
        %v1076 = vpack.c.bf16 %v1060, %v1059
        %v1077 = vld [vmem:[%s6] sm:$0xff]
        %v1078 = vld [vmem:[%s6 + $0x8] sm:$0xff]
        %v1079 = vld [vmem:[%s6 + $0x10] sm:$0xff]
        %v1080 = vld [vmem:[%s6 + $0x18] sm:$0xff]
        %v1081 = vld [vmem:[%s6 + $0x20] sm:$0xff]
        %v1082 = vld [vmem:[%s6 + $0x28] sm:$0xff]
        %v1083 = vld [vmem:[%s6 + $0x30] sm:$0xff]
        %v1084 = vld [vmem:[%s6 + $0x38] sm:$0xff]
        %v1085 = vld [vmem:[%s6 + $0x40] sm:$0xff]
        %v1086 = vld [vmem:[%s6 + $0x48] sm:$0xff]
        %v1087 = vld [vmem:[%s6 + $0x50] sm:$0xff]
        %v1088 = vld [vmem:[%s6 + $0x58] sm:$0xff]
        %v1089 = vld [vmem:[%s6 + $0x60] sm:$0xff]
        %v1090 = vld [vmem:[%s6 + $0x68] sm:$0xff]
        %v1091 = vld [vmem:[%s6 + $0x70] sm:$0xff]
        %v1092 = vld [vmem:[%s6 + $0x78] sm:$0xff]
        %v1093 = vld [vmem:[%s7] sm:$0x3]
        %v1095 = vlaneseq
        %v1096 = vshrl.u32 %v1095, 7
        %v1097 = vsub.s32 0, %v1096
        %v1098 = vrot.slane %v1093, %v1097
        %v1099 = vlaneseq
        %v1100 = vshrl.u32 %v1099, 7
        %v1101 = vsub.s32 1, %v1100
        %v1102 = vrot.slane %v1093, %v1101
        %v1121 = vunpack.c.l.b16 %v1077
        %v1122 = vunpack.c.h.b16 %v1077
        %v1123 = vunpack.c.l.b16 %v1078
        %v1124 = vunpack.c.h.b16 %v1078
        %v1125 = vunpack.c.l.b16 %v1079
        %v1126 = vunpack.c.h.b16 %v1079
        %v1127 = vunpack.c.l.b16 %v1080
        %v1128 = vunpack.c.h.b16 %v1080
        %v1129 = vunpack.c.l.b16 %v1081
        %v1130 = vunpack.c.h.b16 %v1081
        %v1131 = vunpack.c.l.b16 %v1082
        %v1132 = vunpack.c.h.b16 %v1082
        %v1133 = vunpack.c.l.b16 %v1083
        %v1134 = vunpack.c.h.b16 %v1083
        %v1135 = vunpack.c.l.b16 %v1084
        %v1136 = vunpack.c.h.b16 %v1084
        %v1137 = vunpack.c.l.b16 %v1085
        %v1138 = vunpack.c.h.b16 %v1085
        %v1139 = vunpack.c.l.b16 %v1086
        %v1140 = vunpack.c.h.b16 %v1086
        %v1141 = vunpack.c.l.b16 %v1087
        %v1142 = vunpack.c.h.b16 %v1087
        %v1143 = vunpack.c.l.b16 %v1088
        %v1144 = vunpack.c.h.b16 %v1088
        %v1145 = vunpack.c.l.b16 %v1089
        %v1146 = vunpack.c.h.b16 %v1089
        %v1147 = vunpack.c.l.b16 %v1090
        %v1148 = vunpack.c.h.b16 %v1090
        %v1149 = vunpack.c.l.b16 %v1091
        %v1150 = vunpack.c.h.b16 %v1091
        %v1151 = vunpack.c.l.b16 %v1092
        %v1152 = vunpack.c.h.b16 %v1092
        %v1153 = vpack.c.b16 %v1123, %v1121
        %v1154 = vpack.c.b16 %v1124, %v1122
        %v1155 = vpack.c.b16 %v1127, %v1125
        %v1156 = vpack.c.b16 %v1128, %v1126
        %v1157 = vpack.c.b16 %v1131, %v1129
        %v1158 = vpack.c.b16 %v1132, %v1130
        %v1159 = vpack.c.b16 %v1135, %v1133
        %v1160 = vpack.c.b16 %v1136, %v1134
        %v1161 = vpack.c.b16 %v1139, %v1137
        %v1162 = vpack.c.b16 %v1140, %v1138
        %v1163 = vpack.c.b16 %v1143, %v1141
        %v1164 = vpack.c.b16 %v1144, %v1142
        %v1165 = vpack.c.b16 %v1147, %v1145
        %v1166 = vpack.c.b16 %v1148, %v1146
        %v1167 = vpack.c.b16 %v1151, %v1149
        %v1168 = vpack.c.b16 %v1152, %v1150
        %1185 = vmatprep.subr.bf16.mxu0 %v1154
        %1186 = vmatpush1.bf16.msra.mxu0 %v1153
        %1187 = vmatprep.subr.bf16.mxu0 %v1156
        %1188 = vmatpush1.bf16.msra.mxu0 %v1155
        %1189 = vmatprep.subr.bf16.mxu0 %v1158
        %1190 = vmatpush1.bf16.msra.mxu0 %v1157
        %1191 = vmatprep.subr.bf16.mxu0 %v1160
        %1192 = vmatpush1.bf16.msra.mxu0 %v1159
        %1193 = vmatprep.subr.bf16.mxu0 %v1162
        %1194 = vmatpush1.bf16.msra.mxu0 %v1161
        %1195 = vmatprep.subr.bf16.mxu0 %v1164
        %1196 = vmatpush1.bf16.msra.mxu0 %v1163
        %1197 = vmatprep.subr.bf16.mxu0 %v1166
        %1198 = vmatpush1.bf16.msra.mxu0 %v1165
        %1199 = vmatprep.subr.bf16.mxu0 %v1168
        %1200 = vmatpush1.bf16.msra.mxu0 %v1167
        %1201 = vmatprep.subr.bf16.mxu0 0
        %1202 = vmatpush1.bf16.msra.mxu0 0
        %1203 = vmatprep.subr.bf16.mxu0 0
        %1204 = vmatpush1.bf16.msra.mxu0 0
        %1205 = vmatprep.subr.bf16.mxu0 0
        %1206 = vmatpush1.bf16.msra.mxu0 0
        %1207 = vmatprep.subr.bf16.mxu0 0
        %1208 = vmatpush1.bf16.msra.mxu0 0
        %1209 = vmatprep.subr.bf16.mxu0 0
        %1210 = vmatpush1.bf16.msra.mxu0 0
        %1211 = vmatprep.subr.bf16.mxu0 0
        %1212 = vmatpush1.bf16.msra.mxu0 0
        %1213 = vmatprep.subr.bf16.mxu0 0
        %1214 = vmatpush1.bf16.msra.mxu0 0
        %1215 = vmatprep.subr.bf16.mxu0 0
        %1216 = vmatpush1.bf16.msra.mxu0 0
        %1217 = vmatprep.mubr.bf16.mxu0 0
        %1218 = vmatmul.mubr.bf16.gmra.mrb[0].mxu0 %v1061
        %v1219 = vpop.f32.mrb[0].mxu0
        %v1220 = vadd.f32 %v1098, %v1219
        %v1221 = vpop.f32.mrb[0].mxu0
        %v1222 = vadd.f32 %v1102, %v1221
        %v1223 = vpop.f32.mrb[0].mxu0
        %v1224 = vadd.f32 %v1098, %v1223
        %v1225 = vpop.f32.mrb[0].mxu0
        %v1226 = vadd.f32 %v1102, %v1225
        %1227 = vmatprep.mubr.bf16.mxu0 0
        %1228 = vmatmul.mubr.bf16.gmra.mrb[0].mxu0 %v1062
        %v1229 = vpop.f32.mrb[0].mxu0
        %v1230 = vadd.f32 %v1098, %v1229
        %v1231 = vpop.f32.mrb[0].mxu0
        %v1232 = vadd.f32 %v1102, %v1231
        %v1233 = vpop.f32.mrb[0].mxu0
        %v1234 = vadd.f32 %v1098, %v1233
        %v1235 = vpop.f32.mrb[0].mxu0
        %v1236 = vadd.f32 %v1102, %v1235
        %1237 = vmatprep.mubr.bf16.mxu0 0
        %1238 = vmatmul.mubr.bf16.gmra.mrb[0].mxu0 %v1063
        %v1239 = vpop.f32.mrb[0].mxu0
        %v1240 = vadd.f32 %v1098, %v1239
        %v1241 = vpop.f32.mrb[0].mxu0
        %v1242 = vadd.f32 %v1102, %v1241
        %v1243 = vpop.f32.mrb[0].mxu0
        %v1244 = vadd.f32 %v1098, %v1243
        %v1245 = vpop.f32.mrb[0].mxu0
        %v1246 = vadd.f32 %v1102, %v1245
        %1247 = vmatprep.mubr.bf16.mxu0 0
        %1248 = vmatmul.mubr.bf16.gmra.mrb[0].mxu0 %v1064
        %v1249 = vpop.f32.mrb[0].mxu0
        %v1250 = vadd.f32 %v1098, %v1249
        %v1251 = vpop.f32.mrb[0].mxu0
        %v1252 = vadd.f32 %v1102, %v1251
        %v1253 = vpop.f32.mrb[0].mxu0
        %v1254 = vadd.f32 %v1098, %v1253
        %v1255 = vpop.f32.mrb[0].mxu0
        %v1256 = vadd.f32 %v1102, %v1255
        %1257 = vmatprep.mubr.bf16.mxu0 0
        %1258 = vmatmul.mubr.bf16.gmra.mrb[0].mxu0 %v1065
        %v1259 = vpop.f32.mrb[0].mxu0
        %v1260 = vadd.f32 %v1098, %v1259
        %v1261 = vpop.f32.mrb[0].mxu0
        %v1262 = vadd.f32 %v1102, %v1261
        %v1263 = vpop.f32.mrb[0].mxu0
        %v1264 = vadd.f32 %v1098, %v1263
        %v1265 = vpop.f32.mrb[0].mxu0
        %v1266 = vadd.f32 %v1102, %v1265
        %1267 = vmatprep.mubr.bf16.mxu0 0
        %1268 = vmatmul.mubr.bf16.gmra.mrb[0].mxu0 %v1066
        %v1269 = vpop.f32.mrb[0].mxu0
        %v1270 = vadd.f32 %v1098, %v1269
        %v1271 = vpop.f32.mrb[0].mxu0
        %v1272 = vadd.f32 %v1102, %v1271
        %v1273 = vpop.f32.mrb[0].mxu0
        %v1274 = vadd.f32 %v1098, %v1273
        %v1275 = vpop.f32.mrb[0].mxu0
        %v1276 = vadd.f32 %v1102, %v1275
        %1277 = vmatprep.mubr.bf16.mxu0 0
        %1278 = vmatmul.mubr.bf16.gmra.mrb[0].mxu0 %v1067
        %v1279 = vpop.f32.mrb[0].mxu0
        %v1280 = vadd.f32 %v1098, %v1279
        %v1281 = vpop.f32.mrb[0].mxu0
        %v1282 = vadd.f32 %v1102, %v1281
        %v1283 = vpop.f32.mrb[0].mxu0
        %v1284 = vadd.f32 %v1098, %v1283
        %v1285 = vpop.f32.mrb[0].mxu0
        %v1286 = vadd.f32 %v1102, %v1285
        %1287 = vmatprep.mubr.bf16.mxu0 0
        %1288 = vmatmul.mubr.bf16.gmra.mrb[0].mxu0 %v1068
        %v1289 = vpop.f32.mrb[0].mxu0
        %v1290 = vadd.f32 %v1098, %v1289
        %v1291 = vpop.f32.mrb[0].mxu0
        %v1292 = vadd.f32 %v1102, %v1291
        %v1293 = vpop.f32.mrb[0].mxu0
        %v1294 = vadd.f32 %v1098, %v1293
        %v1295 = vpop.f32.mrb[0].mxu0
        %v1296 = vadd.f32 %v1102, %v1295
        %1297 = vmatprep.mubr.bf16.mxu0 0
        %1298 = vmatmul.mubr.bf16.gmra.mrb[0].mxu0 %v1069
        %v1299 = vpop.f32.mrb[0].mxu0
        %v1300 = vadd.f32 %v1098, %v1299
        %v1301 = vpop.f32.mrb[0].mxu0
        %v1302 = vadd.f32 %v1102, %v1301
        %v1303 = vpop.f32.mrb[0].mxu0
        %v1304 = vadd.f32 %v1098, %v1303
        %v1305 = vpop.f32.mrb[0].mxu0
        %v1306 = vadd.f32 %v1102, %v1305
        %1307 = vmatprep.mubr.bf16.mxu0 0
        %1308 = vmatmul.mubr.bf16.gmra.mrb[0].mxu0 %v1070
        %v1309 = vpop.f32.mrb[0].mxu0
        %v1310 = vadd.f32 %v1098, %v1309
        %v1311 = vpop.f32.mrb[0].mxu0
        %v1312 = vadd.f32 %v1102, %v1311
        %v1313 = vpop.f32.mrb[0].mxu0
        %v1314 = vadd.f32 %v1098, %v1313
        %v1315 = vpop.f32.mrb[0].mxu0
        %v1316 = vadd.f32 %v1102, %v1315
        %1317 = vmatprep.mubr.bf16.mxu0 0
        %1318 = vmatmul.mubr.bf16.gmra.mrb[0].mxu0 %v1071
        %v1319 = vpop.f32.mrb[0].mxu0
        %v1320 = vadd.f32 %v1098, %v1319
        %v1321 = vpop.f32.mrb[0].mxu0
        %v1322 = vadd.f32 %v1102, %v1321
        %v1323 = vpop.f32.mrb[0].mxu0
        %v1324 = vadd.f32 %v1098, %v1323
        %v1325 = vpop.f32.mrb[0].mxu0
        %v1326 = vadd.f32 %v1102, %v1325
        %1327 = vmatprep.mubr.bf16.mxu0 0
        %1328 = vmatmul.mubr.bf16.gmra.mrb[0].mxu0 %v1072
        %v1329 = vpop.f32.mrb[0].mxu0
        %v1330 = vadd.f32 %v1098, %v1329
        %v1331 = vpop.f32.mrb[0].mxu0
        %v1332 = vadd.f32 %v1102, %v1331
        %v1333 = vpop.f32.mrb[0].mxu0
        %v1334 = vadd.f32 %v1098, %v1333
        %v1335 = vpop.f32.mrb[0].mxu0
        %v1336 = vadd.f32 %v1102, %v1335
        %1337 = vmatprep.mubr.bf16.mxu0 0
        %1338 = vmatmul.mubr.bf16.gmra.mrb[0].mxu0 %v1073
        %v1339 = vpop.f32.mrb[0].mxu0
        %v1340 = vadd.f32 %v1098, %v1339
        %v1341 = vpop.f32.mrb[0].mxu0
        %v1342 = vadd.f32 %v1102, %v1341
        %v1343 = vpop.f32.mrb[0].mxu0
        %v1344 = vadd.f32 %v1098, %v1343
        %v1345 = vpop.f32.mrb[0].mxu0
        %v1346 = vadd.f32 %v1102, %v1345
        %1347 = vmatprep.mubr.bf16.mxu0 0
        %1348 = vmatmul.mubr.bf16.gmra.mrb[0].mxu0 %v1074
        %v1349 = vpop.f32.mrb[0].mxu0
        %v1350 = vadd.f32 %v1098, %v1349
        %v1351 = vpop.f32.mrb[0].mxu0
        %v1352 = vadd.f32 %v1102, %v1351
        %v1353 = vpop.f32.mrb[0].mxu0
        %v1354 = vadd.f32 %v1098, %v1353
        %v1355 = vpop.f32.mrb[0].mxu0
        %v1356 = vadd.f32 %v1102, %v1355
        %1357 = vmatprep.mubr.bf16.mxu0 0
        %1358 = vmatmul.mubr.bf16.gmra.mrb[0].mxu0 %v1075
        %v1359 = vpop.f32.mrb[0].mxu0
        %v1360 = vadd.f32 %v1098, %v1359
        %v1361 = vpop.f32.mrb[0].mxu0
        %v1362 = vadd.f32 %v1102, %v1361
        %v1363 = vpop.f32.mrb[0].mxu0
        %v1364 = vadd.f32 %v1098, %v1363
        %v1365 = vpop.f32.mrb[0].mxu0
        %v1366 = vadd.f32 %v1102, %v1365
        %1367 = vmatprep.mubr.bf16.mxu0 0
        %1368 = vmatmul.mubr.bf16.gmra.mrb[0].mxu0 %v1076
        %v1369 = vpop.f32.mrb[0].mxu0
        %v1370 = vadd.f32 %v1098, %v1369
        %v1371 = vpop.f32.mrb[0].mxu0
        %v1372 = vadd.f32 %v1102, %v1371
        %v1373 = vpop.f32.mrb[0].mxu0
        %v1374 = vadd.f32 %v1098, %v1373
        %v1375 = vpop.f32.mrb[0].mxu0
        %v1376 = vadd.f32 %v1102, %v1375
        %1377 = vdwg.mxu0
        %v1378 = vld [vmem:[%s398] sm:$0xff]
        %v1379 = vld [vmem:[%s398 + $0x8] sm:$0xff]
        %v1380 = vld [vmem:[%s398 + $0x10] sm:$0xff]
        %v1381 = vld [vmem:[%s398 + $0x18] sm:$0xff]
        %v1382 = vld [vmem:[%s398 + $0x20] sm:$0xff]
        %v1383 = vld [vmem:[%s398 + $0x28] sm:$0xff]
        %v1384 = vld [vmem:[%s398 + $0x30] sm:$0xff]
        %v1385 = vld [vmem:[%s398 + $0x38] sm:$0xff]
        %v1386 = vld [vmem:[%s398 + $0x40] sm:$0xff]
        %v1387 = vld [vmem:[%s398 + $0x48] sm:$0xff]
        %v1388 = vld [vmem:[%s398 + $0x50] sm:$0xff]
        %v1389 = vld [vmem:[%s398 + $0x58] sm:$0xff]
        %v1390 = vld [vmem:[%s398 + $0x60] sm:$0xff]
        %v1391 = vld [vmem:[%s398 + $0x68] sm:$0xff]
        %v1392 = vld [vmem:[%s398 + $0x70] sm:$0xff]
        %v1393 = vld [vmem:[%s398 + $0x78] sm:$0xff]
        %v1394 = vld [vmem:[%s398 + $0x80] sm:$0xff]
        %v1395 = vld [vmem:[%s398 + $0x88] sm:$0xff]
        %v1396 = vld [vmem:[%s398 + $0x90] sm:$0xff]
        %v1397 = vld [vmem:[%s398 + $0x98] sm:$0xff]
        %v1398 = vld [vmem:[%s398 + $0xa0] sm:$0xff]
        %v1399 = vld [vmem:[%s398 + $0xa8] sm:$0xff]
        %v1400 = vld [vmem:[%s398 + $0xb0] sm:$0xff]
        %v1401 = vld [vmem:[%s398 + $0xb8] sm:$0xff]
        %v1402 = vld [vmem:[%s398 + $0xc0] sm:$0xff]
        %v1403 = vld [vmem:[%s398 + $0xc8] sm:$0xff]
        %v1404 = vld [vmem:[%s398 + $0xd0] sm:$0xff]
        %v1405 = vld [vmem:[%s398 + $0xd8] sm:$0xff]
        %v1406 = vld [vmem:[%s398 + $0xe0] sm:$0xff]
        %v1407 = vld [vmem:[%s398 + $0xe8] sm:$0xff]
        %v1408 = vld [vmem:[%s398 + $0xf0] sm:$0xff]
        %v1409 = vld [vmem:[%s398 + $0xf8] sm:$0xff]
        %vm1410 = vcmask 130048
        %v1411 = vsel %vm1410, %v1378, 0.0
        %v1412 = vsel %vm1410, %v1379, 0.0
        %v1413 = vsel %vm1410, %v1380, 0.0
        %v1414 = vsel %vm1410, %v1381, 0.0
        %v1415 = vsel %vm1410, %v1382, 0.0
        %v1416 = vsel %vm1410, %v1383, 0.0
        %v1417 = vsel %vm1410, %v1384, 0.0
        %v1418 = vsel %vm1410, %v1385, 0.0
        %v1419 = vsel %vm1410, %v1386, 0.0
        %v1420 = vsel %vm1410, %v1387, 0.0
        %v1421 = vsel %vm1410, %v1388, 0.0
        %v1422 = vsel %vm1410, %v1389, 0.0
        %v1423 = vsel %vm1410, %v1390, 0.0
        %v1424 = vsel %vm1410, %v1391, 0.0
        %v1425 = vsel %vm1410, %v1392, 0.0
        %v1426 = vsel %vm1410, %v1393, 0.0
        %v1427 = vsel %vm1410, %v1394, 0.0
        %v1428 = vsel %vm1410, %v1395, 0.0
        %v1429 = vsel %vm1410, %v1396, 0.0
        %v1430 = vsel %vm1410, %v1397, 0.0
        %v1431 = vsel %vm1410, %v1398, 0.0
        %v1432 = vsel %vm1410, %v1399, 0.0
        %v1433 = vsel %vm1410, %v1400, 0.0
        %v1434 = vsel %vm1410, %v1401, 0.0
        %v1435 = vsel %vm1410, %v1402, 0.0
        %v1436 = vsel %vm1410, %v1403, 0.0
        %v1437 = vsel %vm1410, %v1404, 0.0
        %v1438 = vsel %vm1410, %v1405, 0.0
        %v1439 = vsel %vm1410, %v1406, 0.0
        %v1440 = vsel %vm1410, %v1407, 0.0
        %v1441 = vsel %vm1410, %v1408, 0.0
        %v1442 = vsel %vm1410, %v1409, 0.0
        %v1443 = vmul.f32 %v1222, 0.5
        %v1444 = vmul.f32 %v1226, 0.5
        %v1445 = vmul.f32 %v1232, 0.5
        %v1446 = vmul.f32 %v1236, 0.5
        %v1447 = vmul.f32 %v1242, 0.5
        %v1448 = vmul.f32 %v1246, 0.5
        %v1449 = vmul.f32 %v1252, 0.5
        %v1450 = vmul.f32 %v1256, 0.5
        %v1451 = vmul.f32 %v1262, 0.5
        %v1452 = vmul.f32 %v1266, 0.5
        %v1453 = vmul.f32 %v1272, 0.5
        %v1454 = vmul.f32 %v1276, 0.5
        %v1455 = vmul.f32 %v1282, 0.5
        %v1456 = vmul.f32 %v1286, 0.5
        %v1457 = vmul.f32 %v1292, 0.5
        %v1458 = vmul.f32 %v1296, 0.5
        %v1459 = vmul.f32 %v1302, 0.5
        %v1460 = vmul.f32 %v1306, 0.5
        %v1461 = vmul.f32 %v1312, 0.5
        %v1462 = vmul.f32 %v1316, 0.5
        %v1463 = vmul.f32 %v1322, 0.5
        %v1464 = vmul.f32 %v1326, 0.5
        %v1465 = vmul.f32 %v1332, 0.5
        %v1466 = vmul.f32 %v1336, 0.5
        %v1467 = vmul.f32 %v1342, 0.5
        %v1468 = vmul.f32 %v1346, 0.5
        %v1469 = vmul.f32 %v1352, 0.5
        %v1470 = vmul.f32 %v1356, 0.5
        %v1471 = vmul.f32 %v1362, 0.5
        %v1472 = vmul.f32 %v1366, 0.5
        %v1473 = vmul.f32 %v1372, 0.5
        %v1474 = vmul.f32 %v1376, 0.5
        %v1475 = vmul.f32 %v1443, 1.442695
        %v1476 = vpow.pop %v1475
        %v1477 = vmul.f32 %v1444, 1.442695
        %v1478 = vpow.pop %v1477
        %v1479 = vmul.f32 %v1445, 1.442695
        %v1480 = vpow.pop %v1479
        %v1481 = vmul.f32 %v1446, 1.442695
        %v1482 = vpow.pop %v1481
        %v1483 = vmul.f32 %v1447, 1.442695
        %v1484 = vpow.pop %v1483
        %v1485 = vmul.f32 %v1448, 1.442695
        %v1486 = vpow.pop %v1485
        %v1487 = vmul.f32 %v1449, 1.442695
        %v1488 = vpow.pop %v1487
        %v1489 = vmul.f32 %v1450, 1.442695
        %v1490 = vpow.pop %v1489
        %v1491 = vmul.f32 %v1451, 1.442695
        %v1492 = vpow.pop %v1491
        %v1493 = vmul.f32 %v1452, 1.442695
        %v1494 = vpow.pop %v1493
        %v1495 = vmul.f32 %v1453, 1.442695
        %v1496 = vpow.pop %v1495
        %v1497 = vmul.f32 %v1454, 1.442695
        %v1498 = vpow.pop %v1497
        %v1499 = vmul.f32 %v1455, 1.442695
        %v1500 = vpow.pop %v1499
        %v1501 = vmul.f32 %v1456, 1.442695
        %v1502 = vpow.pop %v1501
        %v1503 = vmul.f32 %v1457, 1.442695
        %v1504 = vpow.pop %v1503
        %v1505 = vmul.f32 %v1458, 1.442695
        %v1506 = vpow.pop %v1505
        %v1507 = vmul.f32 %v1459, 1.442695
        %v1508 = vpow.pop %v1507
        %v1509 = vmul.f32 %v1460, 1.442695
        %v1510 = vpow.pop %v1509
        %v1511 = vmul.f32 %v1461, 1.442695
        %v1512 = vpow.pop %v1511
        %v1513 = vmul.f32 %v1462, 1.442695
        %v1514 = vpow.pop %v1513
        %v1515 = vmul.f32 %v1463, 1.442695
        %v1516 = vpow.pop %v1515
        %v1517 = vmul.f32 %v1464, 1.442695
        %v1518 = vpow.pop %v1517
        %v1519 = vmul.f32 %v1465, 1.442695
        %v1520 = vpow.pop %v1519
        %v1521 = vmul.f32 %v1466, 1.442695
        %v1522 = vpow.pop %v1521
        %v1523 = vmul.f32 %v1467, 1.442695
        %v1524 = vpow.pop %v1523
        %v1525 = vmul.f32 %v1468, 1.442695
        %v1526 = vpow.pop %v1525
        %v1527 = vmul.f32 %v1469, 1.442695
        %v1528 = vpow.pop %v1527
        %v1529 = vmul.f32 %v1470, 1.442695
        %v1530 = vpow.pop %v1529
        %v1531 = vmul.f32 %v1471, 1.442695
        %v1532 = vpow.pop %v1531
        %v1533 = vmul.f32 %v1472, 1.442695
        %v1534 = vpow.pop %v1533
        %v1535 = vmul.f32 %v1473, 1.442695
        %v1536 = vpow.pop %v1535
        %v1537 = vmul.f32 %v1474, 1.442695
        %v1538 = vpow.pop %v1537
        %v1539 = vmul.f32 %v1476, %v1411
        %v1540 = vmul.f32 %v1478, %v1412
        %v1541 = vmul.f32 %v1480, %v1413
        %v1542 = vmul.f32 %v1482, %v1414
        %v1543 = vmul.f32 %v1484, %v1415
        %v1544 = vmul.f32 %v1486, %v1416
        %v1545 = vmul.f32 %v1488, %v1417
        %v1546 = vmul.f32 %v1490, %v1418
        %v1547 = vmul.f32 %v1492, %v1419
        %v1548 = vmul.f32 %v1494, %v1420
        %v1549 = vmul.f32 %v1496, %v1421
        %v1550 = vmul.f32 %v1498, %v1422
        %v1551 = vmul.f32 %v1500, %v1423
        %v1552 = vmul.f32 %v1502, %v1424
        %v1553 = vmul.f32 %v1504, %v1425
        %v1554 = vmul.f32 %v1506, %v1426
        %v1555 = vmul.f32 %v1508, %v1427
        %v1556 = vmul.f32 %v1510, %v1428
        %v1557 = vmul.f32 %v1512, %v1429
        %v1558 = vmul.f32 %v1514, %v1430
        %v1559 = vmul.f32 %v1516, %v1431
        %v1560 = vmul.f32 %v1518, %v1432
        %v1561 = vmul.f32 %v1520, %v1433
        %v1562 = vmul.f32 %v1522, %v1434
        %v1563 = vmul.f32 %v1524, %v1435
        %v1564 = vmul.f32 %v1526, %v1436
        %v1565 = vmul.f32 %v1528, %v1437
        %v1566 = vmul.f32 %v1530, %v1438
        %v1567 = vmul.f32 %v1532, %v1439
        %v1568 = vmul.f32 %v1534, %v1440
        %v1569 = vmul.f32 %v1536, %v1441
        %v1570 = vmul.f32 %v1538, %v1442
        %v1571 = vadd.f32 %v1220, %v1539
        %v1572 = vadd.f32 %v1224, %v1540
        %v1573 = vadd.f32 %v1230, %v1541
        %v1574 = vadd.f32 %v1234, %v1542
        %v1575 = vadd.f32 %v1240, %v1543
        %v1576 = vadd.f32 %v1244, %v1544
        %v1577 = vadd.f32 %v1250, %v1545
        %v1578 = vadd.f32 %v1254, %v1546
        %v1579 = vadd.f32 %v1260, %v1547
        %v1580 = vadd.f32 %v1264, %v1548
        %v1581 = vadd.f32 %v1270, %v1549
        %v1582 = vadd.f32 %v1274, %v1550
        %v1583 = vadd.f32 %v1280, %v1551
        %v1584 = vadd.f32 %v1284, %v1552
        %v1585 = vadd.f32 %v1290, %v1553
        %v1586 = vadd.f32 %v1294, %v1554
        %v1587 = vadd.f32 %v1300, %v1555
        %v1588 = vadd.f32 %v1304, %v1556
        %v1589 = vadd.f32 %v1310, %v1557
        %v1590 = vadd.f32 %v1314, %v1558
        %v1591 = vadd.f32 %v1320, %v1559
        %v1592 = vadd.f32 %v1324, %v1560
        %v1593 = vadd.f32 %v1330, %v1561
        %v1594 = vadd.f32 %v1334, %v1562
        %v1595 = vadd.f32 %v1340, %v1563
        %v1596 = vadd.f32 %v1344, %v1564
        %v1597 = vadd.f32 %v1350, %v1565
        %v1598 = vadd.f32 %v1354, %v1566
        %v1599 = vadd.f32 %v1360, %v1567
        %v1600 = vadd.f32 %v1364, %v1568
        %v1601 = vadd.f32 %v1370, %v1569
        %v1602 = vadd.f32 %v1374, %v1570
        %1603 = vst [vmem:[%s373] sm:$0xff] %v1571
        %1604 = vst [vmem:[%s373 + $0x8] sm:$0xff] %v1572
        %1605 = vst [vmem:[%s373 + $0x10] sm:$0xff] %v1573
        %1606 = vst [vmem:[%s373 + $0x18] sm:$0xff] %v1574
        %1607 = vst [vmem:[%s373 + $0x20] sm:$0xff] %v1575
        %1608 = vst [vmem:[%s373 + $0x28] sm:$0xff] %v1576
        %1609 = vst [vmem:[%s373 + $0x30] sm:$0xff] %v1577
        %1610 = vst [vmem:[%s373 + $0x38] sm:$0xff] %v1578
        %1611 = vst [vmem:[%s373 + $0x40] sm:$0xff] %v1579
        %1612 = vst [vmem:[%s373 + $0x48] sm:$0xff] %v1580
        %1613 = vst [vmem:[%s373 + $0x50] sm:$0xff] %v1581
        %1614 = vst [vmem:[%s373 + $0x58] sm:$0xff] %v1582
        %1615 = vst [vmem:[%s373 + $0x60] sm:$0xff] %v1583
        %1616 = vst [vmem:[%s373 + $0x68] sm:$0xff] %v1584
        %1617 = vst [vmem:[%s373 + $0x70] sm:$0xff] %v1585
        %1618 = vst [vmem:[%s373 + $0x78] sm:$0xff] %v1586
        %1619 = vst [vmem:[%s373 + $0x80] sm:$0xff] %v1587
        %1620 = vst [vmem:[%s373 + $0x88] sm:$0xff] %v1588
        %1621 = vst [vmem:[%s373 + $0x90] sm:$0xff] %v1589
        %1622 = vst [vmem:[%s373 + $0x98] sm:$0xff] %v1590
        %1623 = vst [vmem:[%s373 + $0xa0] sm:$0xff] %v1591
        %1624 = vst [vmem:[%s373 + $0xa8] sm:$0xff] %v1592
        %1625 = vst [vmem:[%s373 + $0xb0] sm:$0xff] %v1593
        %1626 = vst [vmem:[%s373 + $0xb8] sm:$0xff] %v1594
        %1627 = vst [vmem:[%s373 + $0xc0] sm:$0xff] %v1595
        %1628 = vst [vmem:[%s373 + $0xc8] sm:$0xff] %v1596
        %1629 = vst [vmem:[%s373 + $0xd0] sm:$0xff] %v1597
        %1630 = vst [vmem:[%s373 + $0xd8] sm:$0xff] %v1598
        %1631 = vst [vmem:[%s373 + $0xe0] sm:$0xff] %v1599
        %1632 = vst [vmem:[%s373 + $0xe8] sm:$0xff] %v1600
        %1633 = vst [vmem:[%s373 + $0xf0] sm:$0xff] %v1601
        %1634 = vst [vmem:[%s373 + $0xf8] sm:$0xff] %v1602
        %1635 = vst [vmem:[%s380] sm:$0xff] %v1220
        %1636 = vst [vmem:[%s380 + $0x8] sm:$0xff] %v1224
        %1637 = vst [vmem:[%s380 + $0x10] sm:$0xff] %v1230
        %1638 = vst [vmem:[%s380 + $0x18] sm:$0xff] %v1234
        %1639 = vst [vmem:[%s380 + $0x20] sm:$0xff] %v1240
        %1640 = vst [vmem:[%s380 + $0x28] sm:$0xff] %v1244
        %1641 = vst [vmem:[%s380 + $0x30] sm:$0xff] %v1250
        %1642 = vst [vmem:[%s380 + $0x38] sm:$0xff] %v1254
        %1643 = vst [vmem:[%s380 + $0x40] sm:$0xff] %v1260
        %1644 = vst [vmem:[%s380 + $0x48] sm:$0xff] %v1264
        %1645 = vst [vmem:[%s380 + $0x50] sm:$0xff] %v1270
        %1646 = vst [vmem:[%s380 + $0x58] sm:$0xff] %v1274
        %1647 = vst [vmem:[%s380 + $0x60] sm:$0xff] %v1280
        %1648 = vst [vmem:[%s380 + $0x68] sm:$0xff] %v1284
        %1649 = vst [vmem:[%s380 + $0x70] sm:$0xff] %v1290
        %1650 = vst [vmem:[%s380 + $0x78] sm:$0xff] %v1294
        %1651 = vst [vmem:[%s380 + $0x80] sm:$0xff] %v1300
        %1652 = vst [vmem:[%s380 + $0x88] sm:$0xff] %v1304
        %1653 = vst [vmem:[%s380 + $0x90] sm:$0xff] %v1310
        %1654 = vst [vmem:[%s380 + $0x98] sm:$0xff] %v1314
        %1655 = vst [vmem:[%s380 + $0xa0] sm:$0xff] %v1320
        %1656 = vst [vmem:[%s380 + $0xa8] sm:$0xff] %v1324
        %1657 = vst [vmem:[%s380 + $0xb0] sm:$0xff] %v1330
        %1658 = vst [vmem:[%s380 + $0xb8] sm:$0xff] %v1334
        %1659 = vst [vmem:[%s380 + $0xc0] sm:$0xff] %v1340
        %1660 = vst [vmem:[%s380 + $0xc8] sm:$0xff] %v1344
        %1661 = vst [vmem:[%s380 + $0xd0] sm:$0xff] %v1350
        %1662 = vst [vmem:[%s380 + $0xd8] sm:$0xff] %v1354
        %1663 = vst [vmem:[%s380 + $0xe0] sm:$0xff] %v1360
        %1664 = vst [vmem:[%s380 + $0xe8] sm:$0xff] %v1364
        %1665 = vst [vmem:[%s380 + $0xf0] sm:$0xff] %v1370
        %1666 = vst [vmem:[%s380 + $0xf8] sm:$0xff] %v1374
        %1667 = vst [vmem:[%s387] sm:$0xff] %v1222
        %1668 = vst [vmem:[%s387 + $0x8] sm:$0xff] %v1226
        %1669 = vst [vmem:[%s387 + $0x10] sm:$0xff] %v1232
        %1670 = vst [vmem:[%s387 + $0x18] sm:$0xff] %v1236
        %1671 = vst [vmem:[%s387 + $0x20] sm:$0xff] %v1242
        %1672 = vst [vmem:[%s387 + $0x28] sm:$0xff] %v1246
        %1673 = vst [vmem:[%s387 + $0x30] sm:$0xff] %v1252
        %1674 = vst [vmem:[%s387 + $0x38] sm:$0xff] %v1256
        %1675 = vst [vmem:[%s387 + $0x40] sm:$0xff] %v1262
        %1676 = vst [vmem:[%s387 + $0x48] sm:$0xff] %v1266
        %1677 = vst [vmem:[%s387 + $0x50] sm:$0xff] %v1272
        %1678 = vst [vmem:[%s387 + $0x58] sm:$0xff] %v1276
        %1679 = vst [vmem:[%s387 + $0x60] sm:$0xff] %v1282
        %1680 = vst [vmem:[%s387 + $0x68] sm:$0xff] %v1286
        %1681 = vst [vmem:[%s387 + $0x70] sm:$0xff] %v1292
        %1682 = vst [vmem:[%s387 + $0x78] sm:$0xff] %v1296
        %1683 = vst [vmem:[%s387 + $0x80] sm:$0xff] %v1302
        %1684 = vst [vmem:[%s387 + $0x88] sm:$0xff] %v1306
        %1685 = vst [vmem:[%s387 + $0x90] sm:$0xff] %v1312
        %1686 = vst [vmem:[%s387 + $0x98] sm:$0xff] %v1316
        %1687 = vst [vmem:[%s387 + $0xa0] sm:$0xff] %v1322
        %1688 = vst [vmem:[%s387 + $0xa8] sm:$0xff] %v1326
        %1689 = vst [vmem:[%s387 + $0xb0] sm:$0xff] %v1332
        %1690 = vst [vmem:[%s387 + $0xb8] sm:$0xff] %v1336
        %1691 = vst [vmem:[%s387 + $0xc0] sm:$0xff] %v1342
        %1692 = vst [vmem:[%s387 + $0xc8] sm:$0xff] %v1346
        %1693 = vst [vmem:[%s387 + $0xd0] sm:$0xff] %v1352
        %1694 = vst [vmem:[%s387 + $0xd8] sm:$0xff] %v1356
        %1695 = vst [vmem:[%s387 + $0xe0] sm:$0xff] %v1362
        %1696 = vst [vmem:[%s387 + $0xe8] sm:$0xff] %v1366
        %1697 = vst [vmem:[%s387 + $0xf0] sm:$0xff] %v1372
        %1698 = vst [vmem:[%s387 + $0xf8] sm:$0xff] %v1376
        %s1699 = sand.u32 %s214, 1
        %s1700 = scalar_lea.sflag [#allocation3], %s1699
        %s1701 = sand.u32 %s214, 1
        %s1702 = smul.addr %s1701, 256
        %s1703 = scalar_lea.vmem [#allocation2], %s1702
        %s1704 = sand.u32 %s28, 1
        %s1705 = scalar_lea.sflag [#allocation5], %s1704
        %s1706 = sand.u32 %s240, 1
        %s1707 = smul.addr %s1706, 256
        %s1708 = scalar_lea.vmem [#allocation4], %s1707
        %s1709 = sand.u32 %s28, 1
        %s1710 = scalar_lea.sflag [#allocation5], %s1709
        %s1711 = sand.u32 %s266, 1
        %s1712 = smul.addr %s1711, 256
        %s1713 = scalar_lea.vmem [#allocation6], %s1712
        // Predicated region
        $region53: #{tpu_custom_call.1} parent=51 // pred_check
          %p1714 = pneg %p224
        $region54: #{tpu_custom_call.1} parent=51 // pred_check_branch
          %1716 = sbr.rel (%p1714) target = $region56
        $region55: #{tpu_custom_call.1} parent=51 // pred_region
          %s1717 = smul.u32 32, %s28
          %s1719 = ssub.s32 4096, 4096
          %1720 = vsyncadd %s1700, %s1719
          %s1721 = smul.addr %s1717, 128
          %s1722 = scalar_lea.hbm %s8, %s1721
          %s1723 = sshll.u32 %s1703, 4
          %s1724 = int_to_ptr.vmem [resolvable:$true] %s1723
          %1729 = dma.vmem_to_hbm [thread:$0]  %s1724, 4096, %s1722, %s1700, 128, 128, 8
        $region56: #{tpu_custom_call.1} parent=51 // pred_fallthru
          _
        // Predicated region
        $region57: #{tpu_custom_call.1} parent=51 // pred_check
          %p1730 = pneg %p250
        $region58: #{tpu_custom_call.1} parent=51 // pred_check_branch
          %1732 = sbr.rel (%p1730) target = $region60
        $region59: #{tpu_custom_call.1} parent=51 // pred_region
          %s1733 = smul.u32 32, %s28
          %s1735 = ssub.s32 4096, 4096
          %1736 = vsyncadd %s1705, %s1735
          %s1737 = smul.addr %s1733, 128
          %s1738 = scalar_lea.hbm %s9, %s1737
          %s1739 = sshll.u32 %s1708, 4
          %s1740 = int_to_ptr.vmem [resolvable:$true] %s1739
          %1745 = dma.vmem_to_hbm [thread:$0]  %s1740, 4096, %s1738, %s1705, 128, 128, 8
        $region60: #{tpu_custom_call.1} parent=51 // pred_fallthru
          _
        // Predicated region
        $region61: #{tpu_custom_call.1} parent=51 // pred_check
          %p1746 = pneg %p276
        $region62: #{tpu_custom_call.1} parent=51 // pred_check_branch
          %1748 = sbr.rel (%p1746) target = $region64
        $region63: #{tpu_custom_call.1} parent=51 // pred_region
          %s1749 = smul.u32 32, %s28
          %s1751 = ssub.s32 4096, 4096
          %1752 = vsyncadd %s1710, %s1751
          %s1753 = smul.addr %s1749, 128
          %s1754 = scalar_lea.hbm %s10, %s1753
          %s1755 = sshll.u32 %s1713, 4
          %s1756 = int_to_ptr.vmem [resolvable:$true] %s1755
          %1761 = dma.vmem_to_hbm [thread:$0]  %s1756, 4096, %s1754, %s1710, 128, 128, 8
        $region64: #{tpu_custom_call.1} parent=51 // pred_fallthru
          _
      $region52: #{tpu_custom_call.1} parent=5 // pred_fallthru
        _
      %p1762 = scmp.le.s32.totalorder 2, %s23
      // Predicated region
      $region65: #{tpu_custom_call.1} parent=5 // pred_check
        %p1763 = pneg %p1762
      $region66: #{tpu_custom_call.1} parent=5 // pred_check_branch
        %1765 = sbr.rel (%p1763) target = $region68
      $region67: #{tpu_custom_call.1} parent=5 // pred_region
        %s1766 = ssub.s32 %s23, 2
        // Predicated region
        $region69: #{tpu_custom_call.1} parent=67 // pred_check
          %p1767 = pneg %p230
        $region70: #{tpu_custom_call.1} parent=67 // pred_check_branch
          %1769 = sbr.rel (%p1767) target = $region72
        $region71: #{tpu_custom_call.1} parent=67 // pred_region
          %s1770 = sand.u32 %s215, 1
          %s1771 = scalar_lea.sflag [#allocation3], %s1770
          %s1772 = sand.u32 %s215, 1
          %s1773 = smul.addr %s1772, 256
          %s1774 = scalar_lea.vmem [#allocation2], %s1773
          %1775 = dma.done %s1771, 4096
        $region72: #{tpu_custom_call.1} parent=67 // pred_fallthru
          _
        // Predicated region
        $region73: #{tpu_custom_call.1} parent=67 // pred_check
          %p1776 = pneg %p256
        $region74: #{tpu_custom_call.1} parent=67 // pred_check_branch
          %1778 = sbr.rel (%p1776) target = $region76
        $region75: #{tpu_custom_call.1} parent=67 // pred_region
          %s1779 = sand.u32 %s29, 1
          %s1780 = scalar_lea.sflag [#allocation5], %s1779
          %s1781 = sand.u32 %s241, 1
          %s1782 = smul.addr %s1781, 256
          %s1783 = scalar_lea.vmem [#allocation4], %s1782
          %1784 = dma.done %s1780, 4096
        $region76: #{tpu_custom_call.1} parent=67 // pred_fallthru
          _
        // Predicated region
        $region77: #{tpu_custom_call.1} parent=67 // pred_check
          %p1785 = pneg %p282
        $region78: #{tpu_custom_call.1} parent=67 // pred_check_branch
          %1787 = sbr.rel (%p1785) target = $region80
        $region79: #{tpu_custom_call.1} parent=67 // pred_region
          %s1788 = sand.u32 %s29, 1
          %s1789 = scalar_lea.sflag [#allocation5], %s1788
          %s1790 = sand.u32 %s267, 1
          %s1791 = smul.addr %s1790, 256
          %s1792 = scalar_lea.vmem [#allocation6], %s1791
          %1793 = dma.done %s1789, 4096
        $region80: #{tpu_custom_call.1} parent=67 // pred_fallthru
          _
      $region68: #{tpu_custom_call.1} parent=5 // pred_fallthru
        _
    $region6: #{tpu_custom_call.1} parent=1 // loop_footer
      %s27 = sadd.s32 1, %s23
    $region7: #{tpu_custom_call.1} parent=1 // loop_footer_branch
      %22 = sbr.rel target = $region3
    $region8: #{tpu_custom_call.1} parent=1 // loop_exit
      _
    %1794 = vsyncpa [#allocation3], 1
    %s1795 = scalar_lea.sflag [#allocation3], 1
    %1796 = vsyncpa %s1795, 1
    %1797 = vsyncpa [#allocation5], 1
    %s1798 = scalar_lea.sflag [#allocation5], 1
    %1799 = vsyncpa %s1798, 1

</llo_original>
